<compile_context>
chip_gen: v5e
topology: v5e:2x2
jax: 0.10.0
libtpu: 0.0.40
codegen_flags: <defaults>
</compile_context>

<pallas_src>
import jax
import jax.numpy as jnp
from jax.experimental import pallas as pl
from jax.experimental.pallas import tpu as pltpu

_BN_EPS = 1e-3        # BasicConv2d / last_bn eps in facenet-pytorch
_NORM_EPS = 1e-12     # F.normalize eps

_LANE = 128                       # pad K / Cout / E to multiples of the lane width
_BF16_SUBLANE = 16                # bf16 sublane packing granularity
_TILE_M = 512                     # target rows per grid step (multiple of 16)
_VMEM_LIMIT = 32 * 1024 * 1024    # explicit scoped-VMEM budget (v7x-safe)

_VMEM_SPEC = pl.BlockSpec(memory_space=pltpu.MemorySpace.VMEM)


def _round_up(x, m):
    return (x + m - 1) // m * m


# ---------------------------------------------------------------------------
# Pallas kernels
# ---------------------------------------------------------------------------
def _conv_bn_relu_kernel(p_ref, w_ref, shift_ref, o_ref):
    # patches [TILE_M, Kp] (bf16) @ BN-scaled weight [Kp, Cp] (bf16)
    #   -> f32 accumulate -> + BN shift -> ReLU -> bf16 lane-dense store
    acc = jnp.dot(p_ref[...], w_ref[...], preferred_element_type=jnp.float32)
    o_ref[...] = jnp.maximum(acc + shift_ref[...], 0.0).astype(o_ref.dtype)


def _pool_head_kernel(x_ref, w_ref, shift_ref, o_ref):
    # Fused head: AdaptiveAvgPool2d(1) -> last_linear (bias=False, BN scale
    # folded into W) -> BatchNorm1d shift -> F.normalize(p=2, dim=1).
    pooled = jnp.mean(x_ref[...].astype(jnp.float32), axis=1)          # [N, Cp]
    y = jnp.dot(pooled.astype(jnp.bfloat16), w_ref[...],
                preferred_element_type=jnp.float32)                    # [N, Ep]
    y = y + shift_ref[...]
    # Padded embedding columns are exactly zero, so the L2 norm is exact.
    sq = jnp.sum(y * y, axis=1, keepdims=True)
    o_ref[...] = y * jax.lax.rsqrt(jnp.maximum(sq, _NORM_EPS * _NORM_EPS))


# ---------------------------------------------------------------------------
# Host-side glue: im2col, BN folding, one-time weight prep
# ---------------------------------------------------------------------------
def _im2col(x_nhwc, kh, kw, stride, padding):
    x = x_nhwc.astype(jnp.bfloat16)
    if padding > 0:
        x = jnp.pad(x, ((0, 0), (padding, padding), (padding, padding), (0, 0)))
    n, h, w, c = x.shape
    oh = (h - kh) // stride + 1
    ow = (w - kw) // stride + 1
    cols = []
    for i in range(kh):
        for j in range(kw):
            cols.append(x[:, i:i + stride * (oh - 1) + 1:stride,
                          j:j + stride * (ow - 1) + 1:stride, :])
    patches = jnp.stack(cols, axis=3)                  # [N, oh, ow, kh*kw, C]
    return patches.reshape(n * oh * ow, kh * kw * c), n, oh, ow


def _fold_bn(bn):
    scale = bn["gamma"] / jnp.sqrt(bn["var"] + _BN_EPS)
    shift = bn["beta"] - bn["mean"] * scale
    return scale, shift


def _prep_conv(conv_w, bn, cin_padded, stride, padding):
    """One-time prep of a frozen BasicConv2d: fold BN scale into the weights,
    reorder to (kh*kw*Cin, Cout), zero-pad K / Cout to multiples of 128, bf16."""
    cout, cin, kh, kw = conv_w.shape                   # PyTorch [Cout,Cin,KH,KW]
    scale, shift = _fold_bn(bn)
    w = conv_w * scale[:, None, None, None]            # fold BN scale (one-time)
    if cin_padded > cin:
        w = jnp.pad(w, ((0, 0), (0, cin_padded - cin), (0, 0), (0, 0)))
    k = kh * kw * cin_padded
    w_mat = jnp.transpose(w, (2, 3, 1, 0)).reshape(k, cout)   # matches patch order
    k_pad = _round_up(k, _LANE)
    c_pad = _round_up(cout, _LANE)
    w_mat = jnp.pad(w_mat, ((0, k_pad - k), (0, c_pad - cout)))
    shift = jnp.pad(shift, (0, c_pad - cout))          # zeros => padded chans stay 0
    return dict(w=w_mat.astype(jnp.bfloat16),
                shift=shift[None, :].astype(jnp.float32),
                kh=kh, kw=kw, k=k, k_pad=k_pad, cout=cout, c_pad=c_pad,
                stride=stride, padding=padding)


def _prep_head(lin_w, bn, cin_padded):
    """One-time prep of last_linear (+ folded BatchNorm1d)."""
    e, c = lin_w.shape                                  # PyTorch Linear [E, C]
    scale, shift = _fold_bn(bn)
    w_mat = jnp.transpose(lin_w * scale[:, None], (1, 0))     # [C, E], BN folded
    w_mat = jnp.pad(w_mat, ((0, cin_padded - c), (0, 0)))
    e_pad = _round_up(e, _LANE)
    w_mat = jnp.pad(w_mat, ((0, 0), (0, e_pad - e)))
    shift = jnp.pad(shift, (0, e_pad - e))              # zero pad keeps L2 norm exact
    return dict(w=w_mat.astype(jnp.bfloat16),
                shift=shift[None, :].astype(jnp.float32), e=e, e_pad=e_pad)


# ---------------------------------------------------------------------------
# pallas_call wrappers
# ---------------------------------------------------------------------------
def _conv_bn_relu(x_nhwc, prep):
    patches, n, oh, ow = _im2col(x_nhwc, prep["kh"], prep["kw"],
                                 prep["stride"], prep["padding"])
    m, k = patches.shape
    assert k == prep["k"], (k, prep["k"])
    k_pad, c_pad = prep["k_pad"], prep["c_pad"]
    tile_m = min(_TILE_M, _round_up(m, _BF16_SUBLANE))
    m_pad = _round_up(m, tile_m)
    patches = jnp.pad(patches, ((0, m_pad - m), (0, k_pad - k)))

    out = pl.pallas_call(
        _conv_bn_relu_kernel,
        out_shape=jax.ShapeDtypeStruct((m_pad, c_pad), jnp.bfloat16),
        grid=(m_pad // tile_m,),
        in_specs=[
            pl.BlockSpec((tile_m, k_pad), lambda i: (i, 0)),   # patch rows tile
            pl.BlockSpec((k_pad, c_pad), lambda i: (0, 0)),    # BN-folded weight
            pl.BlockSpec((1, c_pad), lambda i: (0, 0)),        # BN shift
        ],
        out_specs=pl.BlockSpec((tile_m, c_pad), lambda i: (i, 0)),
        compiler_params=pltpu.CompilerParams(
            dimension_semantics=("parallel",),        # v7x: shard M over both TCs
            vmem_limit_bytes=_VMEM_LIMIT),
    )(patches, prep["w"], prep["shift"])
    # Padded output channels are exactly zero: keep them (lane-dense layout for
    # the next layer / head); only trim the padded M rows.
    return out[:m].reshape(n, oh, ow, c_pad)


def _pool_head(x_nhwc, prep):
    n, h, w, c = x_nhwc.shape
    x = x_nhwc.reshape(n, h * w, c)
    out = pl.pallas_call(
        _pool_head_kernel,
        out_shape=jax.ShapeDtypeStruct((n, prep["e_pad"]), jnp.float32),
        in_specs=[_VMEM_SPEC, _VMEM_SPEC, _VMEM_SPEC],
        out_specs=_VMEM_SPEC,
        compiler_params=pltpu.CompilerParams(vmem_limit_bytes=_VMEM_LIMIT),
    )(x, prep["w"], prep["shift"])
    return out[:, :prep["e"]]


# ---------------------------------------------------------------------------
# Model: reduced InceptionResnetV1-style backbone (frozen / eval mode)
# ---------------------------------------------------------------------------
def face_feature_extractor(x_nchw, prepared):
    """Forward pass. Input NCHW float32, output [N, 512] L2-normalized."""
    x = jnp.transpose(x_nchw, (0, 2, 3, 1))                    # -> NHWC
    x = _conv_bn_relu(x, prepared["conv1"])                    # conv2d_1a (s2)
    x = _conv_bn_relu(x, prepared["conv2"])                    # conv2d_2a
    x = _conv_bn_relu(x, prepared["conv3"])                    # conv2d_2b (pad 1)
    # dropout: identity in eval mode
    return _pool_head(x, prepared["head"])   # avgpool_1a + last_linear + last_bn + normalize


def _bn_params(key, c):
    k1, k2, k3, k4 = jax.random.split(key, 4)
    return dict(
        gamma=1.0 + 0.1 * jax.random.normal(k1, (c,), jnp.float32),
        beta=0.1 * jax.random.normal(k2, (c,), jnp.float32),
        mean=0.1 * jax.random.normal(k3, (c,), jnp.float32),
        var=1.0 + 0.5 * jax.random.uniform(k4, (c,), jnp.float32),
    )


def init_params(key):
    ks = jax.random.split(key, 8)
    c1, c2, c3, emb = 32, 32, 64, 512      # real stem channels / embedding dim
    return dict(
        conv1_w=0.1 * jax.random.normal(ks[0], (c1, 3, 3, 3), jnp.float32),
        conv1_bn=_bn_params(ks[1], c1),
        conv2_w=0.1 * jax.random.normal(ks[2], (c2, c1, 3, 3), jnp.float32),
        conv2_bn=_bn_params(ks[3], c2),
        conv3_w=0.1 * jax.random.normal(ks[4], (c3, c2, 3, 3), jnp.float32),
        conv3_bn=_bn_params(ks[5], c3),
        last_linear_w=0.1 * jax.random.normal(ks[6], (emb, c3), jnp.float32),
        last_bn=_bn_params(ks[7], emb),
    )


def prepare_params(params):
    """One-time prep of the frozen eval-mode weights (BN fold + layout + pad)."""
    conv1 = _prep_conv(params["conv1_w"], params["conv1_bn"],
                       cin_padded=params["conv1_w"].shape[1], stride=2, padding=0)
    conv2 = _prep_conv(params["conv2_w"], params["conv2_bn"],
                       cin_padded=conv1["c_pad"], stride=1, padding=0)
    conv3 = _prep_conv(params["conv3_w"], params["conv3_bn"],
                       cin_padded=conv2["c_pad"], stride=1, padding=1)
    head = _prep_head(params["last_linear_w"], params["last_bn"],
                      cin_padded=conv3["c_pad"])
    return dict(conv1=conv1, conv2=conv2, conv3=conv3, head=head)


if __name__ == "__main__":
    x = jax.random.normal(jax.random.PRNGKey(0), (2, 3, 16, 16), dtype=jnp.float32)
    params = init_params(jax.random.PRNGKey(1))
    prepared = prepare_params(params)                 # one-time fold/pad (frozen)

    fwd = jax.jit(lambda inp: face_feature_extractor(inp, prepared))
    out = jax.block_until_ready(fwd(x))

    assert out.shape == (2, 512), out.shape
    # embeddings must be L2-normalized (F.normalize(p=2, dim=1))
    norms = jnp.linalg.norm(out, axis=1)
    assert bool(jnp.all(jnp.abs(norms - 1.0) < 1e-3)), norms
    print("KERNEL_OK")
</pallas_src>

<mosaic_0001>
module attributes {stable_mosaic.version = 11 : i64} {
  func.func @_conv_bn_relu_kernel(%arg0: i32, %arg1: memref<112x128xbf16, #tpu.memory_space<vmem>>, %arg2: memref<128x128xbf16, #tpu.memory_space<vmem>>, %arg3: memref<1x128xf32, #tpu.memory_space<vmem>>, %arg4: memref<112x128xbf16, #tpu.memory_space<vmem>>) attributes {dimension_semantics = [#tpu.dimension_semantics<parallel>], iteration_bounds = array<i64: 1>, scalar_prefetch = 0 : i64, scratch_operands = 0 : i64, tpu.core_type = #tpu.core_type<tc>, window_params = [{transform_indices = @transform_0, window_bounds = array<i64: 112, 128>}, {pipeline_mode = #tpu.pipeline_mode<synchronous>, transform_indices = @transform_1, window_bounds = array<i64: 128, 128>}, {pipeline_mode = #tpu.pipeline_mode<synchronous>, transform_indices = @transform_2, window_bounds = array<i64: 1, 128>}, {transform_indices = @transform_3, window_bounds = array<i64: 112, 128>}]} {
    %c0 = arith.constant 0 : index
    %c0_0 = arith.constant 0 : index
    %0 = vector.load %arg1[%c0, %c0_0] : memref<112x128xbf16, #tpu.memory_space<vmem>>, vector<112x128xbf16>
    %c0_1 = arith.constant 0 : index
    %c0_2 = arith.constant 0 : index
    %1 = vector.load %arg2[%c0_1, %c0_2] : memref<128x128xbf16, #tpu.memory_space<vmem>>, vector<128x128xbf16>
    %cst = arith.constant dense<0.000000e+00> : vector<112x128xf32>
    %2 = tpu.matmul %0, %1, %cst {dimension_numbers = #tpu.dot_dimension_numbers<[1], [0], [0], [1], [0, 0, 1, 1], [], []>} : vector<112x128xbf16>, vector<128x128xbf16>, vector<112x128xf32> -> vector<112x128xf32>
    %c0_3 = arith.constant 0 : index
    %c0_4 = arith.constant 0 : index
    %3 = vector.load %arg3[%c0_3, %c0_4] : memref<1x128xf32, #tpu.memory_space<vmem>>, vector<1x128xf32>
    %4 = vector.broadcast %3 : vector<1x128xf32> to vector<112x128xf32>
    %5 = arith.addf %2, %4 : vector<112x128xf32>
    %cst_5 = arith.constant 0.000000e+00 : f32
    %6 = vector.broadcast %cst_5 : f32 to vector<112x128xf32>
    %7 = arith.maximumf %5, %6 : vector<112x128xf32>
    %8 = arith.truncf %7 : vector<112x128xf32> to vector<112x128xbf16>
    %c0_6 = arith.constant 0 : index
    %c0_7 = arith.constant 0 : index
    %9 = vector.load %arg4[%c0_6, %c0_7] : memref<112x128xbf16, #tpu.memory_space<vmem>>, vector<112x128xbf16>
    tpu.vector_store %arg4[%c0_6, %c0_7], %8 {strides = array<i32>} : memref<112x128xbf16, #tpu.memory_space<vmem>>, vector<112x128xbf16>,
    return
  }
  func.func @transform_0(%arg0: i32) -> (i32, i32) {
    %c0_i32 = arith.constant 0 : i32
    %c0_i32_0 = arith.constant 0 : i32
    return %arg0, %c0_i32 : i32, i32
  }
  func.func @transform_1(%arg0: i32) -> (i32, i32) {
    %c0_i32 = arith.constant 0 : i32
    %c0_i32_0 = arith.constant 0 : i32
    %c0_i32_1 = arith.constant 0 : i32
    return %c0_i32, %c0_i32_0 : i32, i32
  }
  func.func @transform_2(%arg0: i32) -> (i32, i32) {
    %c0_i32 = arith.constant 0 : i32
    %c0_i32_0 = arith.constant 0 : i32
    %c0_i32_1 = arith.constant 0 : i32
    return %c0_i32, %c0_i32_0 : i32, i32
  }
  func.func @transform_3(%arg0: i32) -> (i32, i32) {
    %c0_i32 = arith.constant 0 : i32
    %c0_i32_0 = arith.constant 0 : i32
    return %arg0, %c0_i32 : i32, i32
  }
}

module attributes {stable_mosaic.version = 11 : i64} {
  func.func @_conv_bn_relu_kernel(%arg0: i32, %arg1: memref<64x1152xbf16, #tpu.memory_space<vmem>>, %arg2: memref<1152x128xbf16, #tpu.memory_space<vmem>>, %arg3: memref<1x128xf32, #tpu.memory_space<vmem>>, %arg4: memref<64x128xbf16, #tpu.memory_space<vmem>>) attributes {dimension_semantics = [#tpu.dimension_semantics<parallel>], iteration_bounds = array<i64: 1>, scalar_prefetch = 0 : i64, scratch_operands = 0 : i64, tpu.core_type = #tpu.core_type<tc>, window_params = [{transform_indices = @transform_0, window_bounds = array<i64: 64, 1152>}, {pipeline_mode = #tpu.pipeline_mode<synchronous>, transform_indices = @transform_1, window_bounds = array<i64: 1152, 128>}, {pipeline_mode = #tpu.pipeline_mode<synchronous>, transform_indices = @transform_2, window_bounds = array<i64: 1, 128>}, {transform_indices = @transform_3, window_bounds = array<i64: 64, 128>}]} {
    %c0 = arith.constant 0 : index
    %c0_0 = arith.constant 0 : index
    %0 = vector.load %arg1[%c0, %c0_0] : memref<64x1152xbf16, #tpu.memory_space<vmem>>, vector<64x1152xbf16>
    %c0_1 = arith.constant 0 : index
    %c0_2 = arith.constant 0 : index
    %1 = vector.load %arg2[%c0_1, %c0_2] : memref<1152x128xbf16, #tpu.memory_space<vmem>>, vector<1152x128xbf16>
    %cst = arith.constant dense<0.000000e+00> : vector<64x128xf32>
    %2 = tpu.matmul %0, %1, %cst {dimension_numbers = #tpu.dot_dimension_numbers<[1], [0], [0], [1], [0, 0, 1, 1], [], []>} : vector<64x1152xbf16>, vector<1152x128xbf16>, vector<64x128xf32> -> vector<64x128xf32>
    %c0_3 = arith.constant 0 : index
    %c0_4 = arith.constant 0 : index
    %3 = vector.load %arg3[%c0_3, %c0_4] : memref<1x128xf32, #tpu.memory_space<vmem>>, vector<1x128xf32>
    %4 = vector.broadcast %3 : vector<1x128xf32> to vector<64x128xf32>
    %5 = arith.addf %2, %4 : vector<64x128xf32>
    %cst_5 = arith.constant 0.000000e+00 : f32
    %6 = vector.broadcast %cst_5 : f32 to vector<64x128xf32>
    %7 = arith.maximumf %5, %6 : vector<64x128xf32>
    %8 = arith.truncf %7 : vector<64x128xf32> to vector<64x128xbf16>
    %c0_6 = arith.constant 0 : index
    %c0_7 = arith.constant 0 : index
    %9 = vector.load %arg4[%c0_6, %c0_7] : memref<64x128xbf16, #tpu.memory_space<vmem>>, vector<64x128xbf16>
    tpu.vector_store %arg4[%c0_6, %c0_7], %8 {strides = array<i32>} : memref<64x128xbf16, #tpu.memory_space<vmem>>, vector<64x128xbf16>,
    return
  }
  func.func @transform_0(%arg0: i32) -> (i32, i32) {
    %c0_i32 = arith.constant 0 : i32
    %c0_i32_0 = arith.constant 0 : i32
    return %arg0, %c0_i32 : i32, i32
  }
  func.func @transform_1(%arg0: i32) -> (i32, i32) {
    %c0_i32 = arith.constant 0 : i32
    %c0_i32_0 = arith.constant 0 : i32
    %c0_i32_1 = arith.constant 0 : i32
    return %c0_i32, %c0_i32_0 : i32, i32
  }
  func.func @transform_2(%arg0: i32) -> (i32, i32) {
    %c0_i32 = arith.constant 0 : i32
    %c0_i32_0 = arith.constant 0 : i32
    %c0_i32_1 = arith.constant 0 : i32
    return %c0_i32, %c0_i32_0 : i32, i32
  }
  func.func @transform_3(%arg0: i32) -> (i32, i32) {
    %c0_i32 = arith.constant 0 : i32
    %c0_i32_0 = arith.constant 0 : i32
    return %arg0, %c0_i32 : i32, i32
  }
}

module attributes {stable_mosaic.version = 11 : i64} {
  func.func @_pool_head_kernel(%arg0: memref<2x25x128xbf16, #tpu.memory_space<vmem>>, %arg1: memref<128x512xbf16, #tpu.memory_space<vmem>>, %arg2: memref<1x512xf32, #tpu.memory_space<vmem>>, %arg3: memref<2x512xf32, #tpu.memory_space<vmem>>) attributes {dimension_semantics = [], scalar_prefetch = 0 : i64, scratch_operands = 0 : i64, tpu.core_type = #tpu.core_type<tc>} {
    %c0 = arith.constant 0 : index
    %c0_0 = arith.constant 0 : index
    %c0_1 = arith.constant 0 : index
    %0 = vector.load %arg0[%c0, %c0_0, %c0_1] : memref<2x25x128xbf16, #tpu.memory_space<vmem>>, vector<2x25x128xbf16>
    %1 = arith.extf %0 : vector<2x25x128xbf16> to vector<2x25x128xf32>
    %cst = arith.constant dense<0.000000e+00> : vector<2x128xf32>
    %2 = vector.multi_reduction <add>, %1, %cst [1] : vector<2x25x128xf32> to vector<2x128xf32>
    %cst_2 = arith.constant 2.500000e+01 : f32
    %3 = vector.broadcast %cst_2 : f32 to vector<2x128xf32>
    %4 = arith.divf %2, %3 : vector<2x128xf32>
    %5 = arith.truncf %4 : vector<2x128xf32> to vector<2x128xbf16>
    %c0_3 = arith.constant 0 : index
    %c0_4 = arith.constant 0 : index
    %6 = vector.load %arg1[%c0_3, %c0_4] : memref<128x512xbf16, #tpu.memory_space<vmem>>, vector<128x512xbf16>
    %cst_5 = arith.constant dense<0.000000e+00> : vector<2x512xf32>
    %7 = tpu.matmul %5, %6, %cst_5 {dimension_numbers = #tpu.dot_dimension_numbers<[1], [0], [0], [1], [0, 0, 1, 1], [], []>} : vector<2x128xbf16>, vector<128x512xbf16>, vector<2x512xf32> -> vector<2x512xf32>
    %c0_6 = arith.constant 0 : index
    %c0_7 = arith.constant 0 : index
    %8 = vector.load %arg2[%c0_6, %c0_7] : memref<1x512xf32, #tpu.memory_space<vmem>>, vector<1x512xf32>
    %9 = vector.broadcast %8 : vector<1x512xf32> to vector<2x512xf32>
    %10 = arith.addf %7, %9 : vector<2x512xf32>
    %11 = arith.mulf %10, %10 : vector<2x512xf32>
    %cst_8 = arith.constant dense<0.000000e+00> : vector<2xf32>
    %12 = vector.multi_reduction <add>, %11, %cst_8 [1] : vector<2x512xf32> to vector<2xf32>
    %13 = vector.shape_cast %12 : vector<2xf32> to vector<2x1xf32>
    %cst_9 = arith.constant 1.000000e-24 : f32
    %14 = vector.broadcast %cst_9 : f32 to vector<2x1xf32>
    %15 = arith.maximumf %13, %14 : vector<2x1xf32>
    %16 = math.rsqrt %15 : vector<2x1xf32>
    %17 = vector.broadcast %16 : vector<2x1xf32> to vector<2x512xf32>
    %18 = arith.mulf %10, %17 : vector<2x512xf32>
    %c0_10 = arith.constant 0 : index
    %c0_11 = arith.constant 0 : index
    %19 = vector.load %arg3[%c0_10, %c0_11] : memref<2x512xf32, #tpu.memory_space<vmem>>, vector<2x512xf32>
    tpu.vector_store %arg3[%c0_10, %c0_11], %18 {strides = array<i32>} : memref<2x512xf32, #tpu.memory_space<vmem>>, vector<2x512xf32>,
    return
  }
}

</mosaic_0001>

<llo_original>
// kernel: _lambda_.4
$region0: #{_lambda_.4}
  #allocation0 [shape = 'u32[]', space=smem, size = 0x4, offset = 0x4, fixed_abs, tag = 'smem constant byte address 0x4 - core index']
  #allocation1 [shape = 'u32[72,128]{1,0:T(1,128)}', space=vmem, size = 0x9000, scoped, tag = 'internal scratch']
  %s0 = inlined_call_operand.vmem [shape: bf16[112,128], index: 0, kind: input, shape index: {}]
  %s1 = inlined_call_operand.vmem [shape: bf16[128,128], index: 1, kind: input, shape index: {}]
  %s2 = inlined_call_operand.vmem [shape: f32[1,128], index: 2, kind: input, shape index: {}]
  %s3 = inlined_call_operand.vmem [shape: bf16[112,128], index: 3, kind: output, shape index: {}]
  %s4 = sld [smem:[#allocation0]]
  $region22: #{_lambda_.4} parent=0
    _
  %s6 = ssub.s32 1, %s4
  %s7 = scalar_select 0, %s6, %s4
  // Predicated region
  $region2: #{_lambda_.4} parent=0 // pred_check
    _
  $region3: #{_lambda_.4} parent=0 // pred_check_branch
    %9 = sbr.rel (0) target = $region5
  $region4: #{_lambda_.4} parent=0 // pred_region
    _
  $region5: #{_lambda_.4} parent=0 // pred_fallthru
    _
  // Predicated region
  $region6: #{_lambda_.4} parent=0 // pred_check
    _
  $region7: #{_lambda_.4} parent=0 // pred_check_branch
    %11 = sbr.rel (0) target = $region9
  $region8: #{_lambda_.4} parent=0 // pred_region
    _
  $region9: #{_lambda_.4} parent=0 // pred_fallthru
    _
  // Predicated region
  $region10: #{_lambda_.4} parent=0 // pred_check
    _
  $region11: #{_lambda_.4} parent=0 // pred_check_branch
    %13 = sbr.rel (0) target = $region13
  $region12: #{_lambda_.4} parent=0 // pred_region
    _
  $region13: #{_lambda_.4} parent=0 // pred_fallthru
    _
  %v14 = vld [vmem:[%s0] sm:$0xf]
  %v15 = vld [vmem:[%s0 + $0x4] sm:$0xf]
  %v16 = vld [vmem:[%s0 + $0x8] sm:$0xf]
  %v17 = vld [vmem:[%s0 + $0xc] sm:$0xf]
  %v18 = vld [vmem:[%s0 + $0x10] sm:$0xf]
  %v19 = vld [vmem:[%s0 + $0x14] sm:$0xf]
  %v20 = vld [vmem:[%s0 + $0x18] sm:$0xf]
  %v21 = vld [vmem:[%s0 + $0x1c] sm:$0xf]
  %v22 = vld [vmem:[%s0 + $0x20] sm:$0xf]
  %v23 = vld [vmem:[%s0 + $0x24] sm:$0xf]
  %v24 = vld [vmem:[%s0 + $0x28] sm:$0xf]
  %v25 = vld [vmem:[%s0 + $0x2c] sm:$0xf]
  %v26 = vld [vmem:[%s0 + $0x30] sm:$0xf]
  %v27 = vld [vmem:[%s0 + $0x34] sm:$0xf]
  %v28 = vld [vmem:[%s1] sm:$0xf]
  %v29 = vld [vmem:[%s1 + $0x4] sm:$0xf]
  %v30 = vld [vmem:[%s1 + $0x8] sm:$0xf]
  %v31 = vld [vmem:[%s1 + $0xc] sm:$0xf]
  %v32 = vld [vmem:[%s1 + $0x10] sm:$0xf]
  %v33 = vld [vmem:[%s1 + $0x14] sm:$0xf]
  %v34 = vld [vmem:[%s1 + $0x18] sm:$0xf]
  %v35 = vld [vmem:[%s1 + $0x1c] sm:$0xf]
  %v36 = vld [vmem:[%s1 + $0x20] sm:$0xf]
  %v37 = vld [vmem:[%s1 + $0x24] sm:$0xf]
  %v38 = vld [vmem:[%s1 + $0x28] sm:$0xf]
  %v39 = vld [vmem:[%s1 + $0x2c] sm:$0xf]
  %v40 = vld [vmem:[%s1 + $0x30] sm:$0xf]
  %v41 = vld [vmem:[%s1 + $0x34] sm:$0xf]
  %v42 = vld [vmem:[%s1 + $0x38] sm:$0xf]
  %v43 = vld [vmem:[%s1 + $0x3c] sm:$0xf]
  %v44 = vld [vmem:[%s2] sm:$0x1]
  %v46 = vperm.slane %v44, 0
  %v62 = vunpack.c.l.b16 %v14
  %v63 = vunpack.c.l.b16 %v15
  %v64 = vunpack.c.l.b16 %v16
  %v65 = vunpack.c.l.b16 %v17
  %v66 = vunpack.c.l.b16 %v18
  %v67 = vunpack.c.l.b16 %v19
  %v68 = vunpack.c.l.b16 %v20
  %v69 = vunpack.c.l.b16 %v21
  %v70 = vunpack.c.l.b16 %v22
  %v71 = vunpack.c.l.b16 %v23
  %v72 = vunpack.c.l.b16 %v24
  %v73 = vunpack.c.l.b16 %v25
  %v74 = vunpack.c.l.b16 %v26
  %v75 = vunpack.c.l.b16 %v27
  %v76 = vpack.c.b16 %v63, %v62
  %v77 = vpack.c.b16 %v65, %v64
  %v78 = vpack.c.b16 %v67, %v66
  %v79 = vpack.c.b16 %v69, %v68
  %v80 = vpack.c.b16 %v71, %v70
  %v81 = vpack.c.b16 %v73, %v72
  %v82 = vpack.c.b16 %v75, %v74
  %v106 = vunpack.c.l.b16 %v28
  %v107 = vunpack.c.l.b16 %v29
  %v108 = vunpack.c.l.b16 %v30
  %v109 = vunpack.c.l.b16 %v31
  %v110 = vunpack.c.l.b16 %v32
  %v111 = vunpack.c.l.b16 %v33
  %v112 = vunpack.c.l.b16 %v34
  %v113 = vunpack.c.l.b16 %v35
  %v114 = vunpack.c.l.b16 %v36
  %v115 = vunpack.c.l.b16 %v37
  %v116 = vunpack.c.l.b16 %v38
  %v117 = vunpack.c.l.b16 %v39
  %v118 = vunpack.c.l.b16 %v40
  %v119 = vunpack.c.l.b16 %v41
  %v120 = vunpack.c.l.b16 %v42
  %v121 = vunpack.c.l.b16 %v43
  %v122 = vpack.c.b16 %v107, %v106
  %v123 = vpack.c.b16 %v109, %v108
  %v124 = vpack.c.b16 %v111, %v110
  %v125 = vpack.c.b16 %v113, %v112
  %v126 = vpack.c.b16 %v115, %v114
  %v127 = vpack.c.b16 %v117, %v116
  %v128 = vpack.c.b16 %v119, %v118
  %v129 = vpack.c.b16 %v121, %v120
  %138 = vmatpush.bf16.msra.mxu0 %v129
  %139 = vmatpush.bf16.msra.mxu0 %v128
  %140 = vmatpush.bf16.msra.mxu0 %v127
  %141 = vmatpush.bf16.msra.mxu0 %v126
  %142 = vmatpush.bf16.msra.mxu0 %v125
  %143 = vmatpush.bf16.msra.mxu0 %v124
  %144 = vmatpush.bf16.msra.mxu0 %v123
  %145 = vmatpush.bf16.msra.mxu0 %v122
  %146 = vmatmul.bf16.gmra.mxu0 %v76
  %v147 = vpop.f32.mrf.mxu0
  %v148 = vadd.f32 %v46, %v147
  %v149 = vpop.f32.mrf.mxu0
  %v150 = vadd.f32 %v46, %v149
  %151 = vmatmul.bf16.gmra.mxu0 %v77
  %v152 = vpop.f32.mrf.mxu0
  %v153 = vadd.f32 %v46, %v152
  %v154 = vpop.f32.mrf.mxu0
  %v155 = vadd.f32 %v46, %v154
  %156 = vmatmul.bf16.gmra.mxu0 %v78
  %v157 = vpop.f32.mrf.mxu0
  %v158 = vadd.f32 %v46, %v157
  %v159 = vpop.f32.mrf.mxu0
  %v160 = vadd.f32 %v46, %v159
  %161 = vmatmul.bf16.gmra.mxu0 %v79
  %v162 = vpop.f32.mrf.mxu0
  %v163 = vadd.f32 %v46, %v162
  %v164 = vpop.f32.mrf.mxu0
  %v165 = vadd.f32 %v46, %v164
  %166 = vmatmul.bf16.gmra.mxu0 %v80
  %v167 = vpop.f32.mrf.mxu0
  %v168 = vadd.f32 %v46, %v167
  %v169 = vpop.f32.mrf.mxu0
  %v170 = vadd.f32 %v46, %v169
  %171 = vmatmul.bf16.gmra.mxu0 %v81
  %v172 = vpop.f32.mrf.mxu0
  %v173 = vadd.f32 %v46, %v172
  %v174 = vpop.f32.mrf.mxu0
  %v175 = vadd.f32 %v46, %v174
  %176 = vmatmul.bf16.gmra.mxu0 %v82
  %v177 = vpop.f32.mrf.mxu0
  %v178 = vadd.f32 %v46, %v177
  %v179 = vpop.f32.mrf.mxu0
  %v180 = vadd.f32 %v46, %v179
  %181 = vdwg.mxu0
  %v182 = vmax.f32 %v148, 0.0
  %v183 = vmax.f32 %v150, 0.0
  %v184 = vmax.f32 %v153, 0.0
  %v185 = vmax.f32 %v155, 0.0
  %v186 = vmax.f32 %v158, 0.0
  %v187 = vmax.f32 %v160, 0.0
  %v188 = vmax.f32 %v163, 0.0
  %v189 = vmax.f32 %v165, 0.0
  %v190 = vmax.f32 %v168, 0.0
  %v191 = vmax.f32 %v170, 0.0
  %v192 = vmax.f32 %v173, 0.0
  %v193 = vmax.f32 %v175, 0.0
  %v194 = vmax.f32 %v178, 0.0
  %v195 = vmax.f32 %v180, 0.0
  %v196 = vpack.c.bf16 %v182, %v182
  %v197 = vpack.c.bf16 %v183, %v183
  %v198 = vpack.c.bf16 %v184, %v184
  %v199 = vpack.c.bf16 %v185, %v185
  %v200 = vpack.c.bf16 %v186, %v186
  %v201 = vpack.c.bf16 %v187, %v187
  %v202 = vpack.c.bf16 %v188, %v188
  %v203 = vpack.c.bf16 %v189, %v189
  %v204 = vpack.c.bf16 %v190, %v190
  %v205 = vpack.c.bf16 %v191, %v191
  %v206 = vpack.c.bf16 %v192, %v192
  %v207 = vpack.c.bf16 %v193, %v193
  %v208 = vpack.c.bf16 %v194, %v194
  %v209 = vpack.c.bf16 %v195, %v195
  %210 = vst [vmem:[%s3] sm:$0xf] %v196
  %211 = vst [vmem:[%s3 + $0x4] sm:$0xf] %v197
  %212 = vst [vmem:[%s3 + $0x8] sm:$0xf] %v198
  %213 = vst [vmem:[%s3 + $0xc] sm:$0xf] %v199
  %214 = vst [vmem:[%s3 + $0x10] sm:$0xf] %v200
  %215 = vst [vmem:[%s3 + $0x14] sm:$0xf] %v201
  %216 = vst [vmem:[%s3 + $0x18] sm:$0xf] %v202
  %217 = vst [vmem:[%s3 + $0x1c] sm:$0xf] %v203
  %218 = vst [vmem:[%s3 + $0x20] sm:$0xf] %v204
  %219 = vst [vmem:[%s3 + $0x24] sm:$0xf] %v205
  %220 = vst [vmem:[%s3 + $0x28] sm:$0xf] %v206
  %221 = vst [vmem:[%s3 + $0x2c] sm:$0xf] %v207
  %222 = vst [vmem:[%s3 + $0x30] sm:$0xf] %v208
  %223 = vst [vmem:[%s3 + $0x34] sm:$0xf] %v209
  // Predicated region
  $region14: #{_lambda_.4} parent=0 // pred_check
    _
  $region15: #{_lambda_.4} parent=0 // pred_check_branch
    %225 = sbr.rel (0) target = $region17
  $region16: #{_lambda_.4} parent=0 // pred_region
    _
  $region17: #{_lambda_.4} parent=0 // pred_fallthru
    _
  // Predicated region
  $region18: #{_lambda_.4} parent=0 // pred_check
    _
  $region19: #{_lambda_.4} parent=0 // pred_check_branch
    %227 = sbr.rel (0) target = $region21
  $region20: #{_lambda_.4} parent=0 // pred_region
    _
  $region21: #{_lambda_.4} parent=0 // pred_fallthru
    _

// kernel: _lambda_.5
$region0: #{_lambda_.5}
  #allocation0 [shape = 'u32[]', space=smem, size = 0x4, offset = 0x4, fixed_abs, tag = 'smem constant byte address 0x4 - core index']
  #allocation1 [shape = 'u32[72,128]{1,0:T(1,128)}', space=vmem, size = 0x9000, scoped, tag = 'internal scratch']
  %s0 = inlined_call_operand.vmem [shape: bf16[64,1152], index: 0, kind: input, shape index: {}]
  %s1 = inlined_call_operand.vmem [shape: bf16[1152,128], index: 1, kind: input, shape index: {}]
  %s2 = inlined_call_operand.vmem [shape: f32[1,128], index: 2, kind: input, shape index: {}]
  %s3 = inlined_call_operand.vmem [shape: bf16[64,128], index: 3, kind: output, shape index: {}]
  %s4 = sld [smem:[#allocation0]]
  $region22: #{_lambda_.5} parent=0
    _
  %s6 = ssub.s32 1, %s4
  %s7 = scalar_select 0, %s6, %s4
  // Predicated region
  $region2: #{_lambda_.5} parent=0 // pred_check
    _
  $region3: #{_lambda_.5} parent=0 // pred_check_branch
    %9 = sbr.rel (0) target = $region5
  $region4: #{_lambda_.5} parent=0 // pred_region
    _
  $region5: #{_lambda_.5} parent=0 // pred_fallthru
    _
  // Predicated region
  $region6: #{_lambda_.5} parent=0 // pred_check
    _
  $region7: #{_lambda_.5} parent=0 // pred_check_branch
    %11 = sbr.rel (0) target = $region9
  $region8: #{_lambda_.5} parent=0 // pred_region
    _
  $region9: #{_lambda_.5} parent=0 // pred_fallthru
    _
  // Predicated region
  $region10: #{_lambda_.5} parent=0 // pred_check
    _
  $region11: #{_lambda_.5} parent=0 // pred_check_branch
    %13 = sbr.rel (0) target = $region13
  $region12: #{_lambda_.5} parent=0 // pred_region
    _
  $region13: #{_lambda_.5} parent=0 // pred_fallthru
    _
  %v14 = vld [vmem:[%s0] sm:$0xff]
  %v15 = vld [vmem:[%s0 + $0x8] sm:$0xff]
  %v16 = vld [vmem:[%s0 + $0x10] sm:$0xff]
  %v17 = vld [vmem:[%s0 + $0x18] sm:$0xff]
  %v18 = vld [vmem:[%s0 + $0x20] sm:$0xf]
  %v19 = vld [vmem:[%s0 + $0x24] sm:$0xff]
  %v20 = vld [vmem:[%s0 + $0x2c] sm:$0xff]
  %v21 = vld [vmem:[%s0 + $0x34] sm:$0xff]
  %v22 = vld [vmem:[%s0 + $0x3c] sm:$0xff]
  %v23 = vld [vmem:[%s0 + $0x44] sm:$0xf]
  %v24 = vld [vmem:[%s0 + $0x48] sm:$0xff]
  %v25 = vld [vmem:[%s0 + $0x50] sm:$0xff]
  %v26 = vld [vmem:[%s0 + $0x58] sm:$0xff]
  %v27 = vld [vmem:[%s0 + $0x60] sm:$0xff]
  %v28 = vld [vmem:[%s0 + $0x68] sm:$0xf]
  %v29 = vld [vmem:[%s0 + $0x6c] sm:$0xff]
  %v30 = vld [vmem:[%s0 + $0x74] sm:$0xff]
  %v31 = vld [vmem:[%s0 + $0x7c] sm:$0xff]
  %v32 = vld [vmem:[%s0 + $0x84] sm:$0xff]
  %v33 = vld [vmem:[%s0 + $0x8c] sm:$0xf]
  %v34 = vld [vmem:[%s0 + $0x90] sm:$0xff]
  %v35 = vld [vmem:[%s0 + $0x98] sm:$0xff]
  %v36 = vld [vmem:[%s0 + $0xa0] sm:$0xff]
  %v37 = vld [vmem:[%s0 + $0xa8] sm:$0xff]
  %v38 = vld [vmem:[%s0 + $0xb0] sm:$0xf]
  %v39 = vld [vmem:[%s0 + $0xb4] sm:$0xff]
  %v40 = vld [vmem:[%s0 + $0xbc] sm:$0xff]
  %v41 = vld [vmem:[%s0 + $0xc4] sm:$0xff]
  %v42 = vld [vmem:[%s0 + $0xcc] sm:$0xff]
  %v43 = vld [vmem:[%s0 + $0xd4] sm:$0xf]
  %v44 = vld [vmem:[%s0 + $0xd8] sm:$0xff]
  %v45 = vld [vmem:[%s0 + $0xe0] sm:$0xff]
  %v46 = vld [vmem:[%s0 + $0xe8] sm:$0xff]
  %v47 = vld [vmem:[%s0 + $0xf0] sm:$0xff]
  %v48 = vld [vmem:[%s0 + $0xf8] sm:$0xf]
  %v49 = vld [vmem:[%s0 + $0xfc] sm:$0xff]
  %v50 = vld [vmem:[%s0 + $0x104] sm:$0xff]
  %v51 = vld [vmem:[%s0 + $0x10c] sm:$0xff]
  %v52 = vld [vmem:[%s0 + $0x114] sm:$0xff]
  %v53 = vld [vmem:[%s0 + $0x11c] sm:$0xf]
  %v54 = vld [vmem:[%s1] sm:$0xf]
  %v55 = vld [vmem:[%s1 + $0x4] sm:$0xf]
  %v56 = vld [vmem:[%s1 + $0x8] sm:$0xf]
  %v57 = vld [vmem:[%s1 + $0xc] sm:$0xf]
  %v58 = vld [vmem:[%s1 + $0x10] sm:$0xf]
  %v59 = vld [vmem:[%s1 + $0x14] sm:$0xf]
  %v60 = vld [vmem:[%s1 + $0x18] sm:$0xf]
  %v61 = vld [vmem:[%s1 + $0x1c] sm:$0xf]
  %v62 = vld [vmem:[%s1 + $0x20] sm:$0xf]
  %v63 = vld [vmem:[%s1 + $0x24] sm:$0xf]
  %v64 = vld [vmem:[%s1 + $0x28] sm:$0xf]
  %v65 = vld [vmem:[%s1 + $0x2c] sm:$0xf]
  %v66 = vld [vmem:[%s1 + $0x30] sm:$0xf]
  %v67 = vld [vmem:[%s1 + $0x34] sm:$0xf]
  %v68 = vld [vmem:[%s1 + $0x38] sm:$0xf]
  %v69 = vld [vmem:[%s1 + $0x3c] sm:$0xf]
  %v70 = vld [vmem:[%s1 + $0x40] sm:$0xf]
  %v71 = vld [vmem:[%s1 + $0x44] sm:$0xf]
  %v72 = vld [vmem:[%s1 + $0x48] sm:$0xf]
  %v73 = vld [vmem:[%s1 + $0x4c] sm:$0xf]
  %v74 = vld [vmem:[%s1 + $0x50] sm:$0xf]
  %v75 = vld [vmem:[%s1 + $0x54] sm:$0xf]
  %v76 = vld [vmem:[%s1 + $0x58] sm:$0xf]
  %v77 = vld [vmem:[%s1 + $0x5c] sm:$0xf]
  %v78 = vld [vmem:[%s1 + $0x60] sm:$0xf]
  %v79 = vld [vmem:[%s1 + $0x64] sm:$0xf]
  %v80 = vld [vmem:[%s1 + $0x68] sm:$0xf]
  %v81 = vld [vmem:[%s1 + $0x6c] sm:$0xf]
  %v82 = vld [vmem:[%s1 + $0x70] sm:$0xf]
  %v83 = vld [vmem:[%s1 + $0x74] sm:$0xf]
  %v84 = vld [vmem:[%s1 + $0x78] sm:$0xf]
  %v85 = vld [vmem:[%s1 + $0x7c] sm:$0xf]
  %v86 = vld [vmem:[%s1 + $0x80] sm:$0xf]
  %v87 = vld [vmem:[%s1 + $0x84] sm:$0xf]
  %v88 = vld [vmem:[%s1 + $0x88] sm:$0xf]
  %v89 = vld [vmem:[%s1 + $0x8c] sm:$0xf]
  %v90 = vld [vmem:[%s1 + $0x90] sm:$0xf]
  %v91 = vld [vmem:[%s1 + $0x94] sm:$0xf]
  %v92 = vld [vmem:[%s1 + $0x98] sm:$0xf]
  %v93 = vld [vmem:[%s1 + $0x9c] sm:$0xf]
  %v94 = vld [vmem:[%s1 + $0xa0] sm:$0xf]
  %v95 = vld [vmem:[%s1 + $0xa4] sm:$0xf]
  %v96 = vld [vmem:[%s1 + $0xa8] sm:$0xf]
  %v97 = vld [vmem:[%s1 + $0xac] sm:$0xf]
  %v98 = vld [vmem:[%s1 + $0xb0] sm:$0xf]
  %v99 = vld [vmem:[%s1 + $0xb4] sm:$0xf]
  %v100 = vld [vmem:[%s1 + $0xb8] sm:$0xf]
  %v101 = vld [vmem:[%s1 + $0xbc] sm:$0xf]
  %v102 = vld [vmem:[%s1 + $0xc0] sm:$0xf]
  %v103 = vld [vmem:[%s1 + $0xc4] sm:$0xf]
  %v104 = vld [vmem:[%s1 + $0xc8] sm:$0xf]
  %v105 = vld [vmem:[%s1 + $0xcc] sm:$0xf]
  %v106 = vld [vmem:[%s1 + $0xd0] sm:$0xf]
  %v107 = vld [vmem:[%s1 + $0xd4] sm:$0xf]
  %v108 = vld [vmem:[%s1 + $0xd8] sm:$0xf]
  %v109 = vld [vmem:[%s1 + $0xdc] sm:$0xf]
  %v110 = vld [vmem:[%s1 + $0xe0] sm:$0xf]
  %v111 = vld [vmem:[%s1 + $0xe4] sm:$0xf]
  %v112 = vld [vmem:[%s1 + $0xe8] sm:$0xf]
  %v113 = vld [vmem:[%s1 + $0xec] sm:$0xf]
  %v114 = vld [vmem:[%s1 + $0xf0] sm:$0xf]
  %v115 = vld [vmem:[%s1 + $0xf4] sm:$0xf]
  %v116 = vld [vmem:[%s1 + $0xf8] sm:$0xf]
  %v117 = vld [vmem:[%s1 + $0xfc] sm:$0xf]
  %v118 = vld [vmem:[%s1 + $0x100] sm:$0xf]
  %v119 = vld [vmem:[%s1 + $0x104] sm:$0xf]
  %v120 = vld [vmem:[%s1 + $0x108] sm:$0xf]
  %v121 = vld [vmem:[%s1 + $0x10c] sm:$0xf]
  %v122 = vld [vmem:[%s1 + $0x110] sm:$0xf]
  %v123 = vld [vmem:[%s1 + $0x114] sm:$0xf]
  %v124 = vld [vmem:[%s1 + $0x118] sm:$0xf]
  %v125 = vld [vmem:[%s1 + $0x11c] sm:$0xf]
  %v126 = vld [vmem:[%s1 + $0x120] sm:$0xf]
  %v127 = vld [vmem:[%s1 + $0x124] sm:$0xf]
  %v128 = vld [vmem:[%s1 + $0x128] sm:$0xf]
  %v129 = vld [vmem:[%s1 + $0x12c] sm:$0xf]
  %v130 = vld [vmem:[%s1 + $0x130] sm:$0xf]
  %v131 = vld [vmem:[%s1 + $0x134] sm:$0xf]
  %v132 = vld [vmem:[%s1 + $0x138] sm:$0xf]
  %v133 = vld [vmem:[%s1 + $0x13c] sm:$0xf]
  %v134 = vld [vmem:[%s1 + $0x140] sm:$0xf]
  %v135 = vld [vmem:[%s1 + $0x144] sm:$0xf]
  %v136 = vld [vmem:[%s1 + $0x148] sm:$0xf]
  %v137 = vld [vmem:[%s1 + $0x14c] sm:$0xf]
  %v138 = vld [vmem:[%s1 + $0x150] sm:$0xf]
  %v139 = vld [vmem:[%s1 + $0x154] sm:$0xf]
  %v140 = vld [vmem:[%s1 + $0x158] sm:$0xf]
  %v141 = vld [vmem:[%s1 + $0x15c] sm:$0xf]
  %v142 = vld [vmem:[%s1 + $0x160] sm:$0xf]
  %v143 = vld [vmem:[%s1 + $0x164] sm:$0xf]
  %v144 = vld [vmem:[%s1 + $0x168] sm:$0xf]
  %v145 = vld [vmem:[%s1 + $0x16c] sm:$0xf]
  %v146 = vld [vmem:[%s1 + $0x170] sm:$0xf]
  %v147 = vld [vmem:[%s1 + $0x174] sm:$0xf]
  %v148 = vld [vmem:[%s1 + $0x178] sm:$0xf]
  %v149 = vld [vmem:[%s1 + $0x17c] sm:$0xf]
  %v150 = vld [vmem:[%s1 + $0x180] sm:$0xf]
  %v151 = vld [vmem:[%s1 + $0x184] sm:$0xf]
  %v152 = vld [vmem:[%s1 + $0x188] sm:$0xf]
  %v153 = vld [vmem:[%s1 + $0x18c] sm:$0xf]
  %v154 = vld [vmem:[%s1 + $0x190] sm:$0xf]
  %v155 = vld [vmem:[%s1 + $0x194] sm:$0xf]
  %v156 = vld [vmem:[%s1 + $0x198] sm:$0xf]
  %v157 = vld [vmem:[%s1 + $0x19c] sm:$0xf]
  %v158 = vld [vmem:[%s1 + $0x1a0] sm:$0xf]
  %v159 = vld [vmem:[%s1 + $0x1a4] sm:$0xf]
  %v160 = vld [vmem:[%s1 + $0x1a8] sm:$0xf]
  %v161 = vld [vmem:[%s1 + $0x1ac] sm:$0xf]
  %v162 = vld [vmem:[%s1 + $0x1b0] sm:$0xf]
  %v163 = vld [vmem:[%s1 + $0x1b4] sm:$0xf]
  %v164 = vld [vmem:[%s1 + $0x1b8] sm:$0xf]
  %v165 = vld [vmem:[%s1 + $0x1bc] sm:$0xf]
  %v166 = vld [vmem:[%s1 + $0x1c0] sm:$0xf]
  %v167 = vld [vmem:[%s1 + $0x1c4] sm:$0xf]
  %v168 = vld [vmem:[%s1 + $0x1c8] sm:$0xf]
  %v169 = vld [vmem:[%s1 + $0x1cc] sm:$0xf]
  %v170 = vld [vmem:[%s1 + $0x1d0] sm:$0xf]
  %v171 = vld [vmem:[%s1 + $0x1d4] sm:$0xf]
  %v172 = vld [vmem:[%s1 + $0x1d8] sm:$0xf]
  %v173 = vld [vmem:[%s1 + $0x1dc] sm:$0xf]
  %v174 = vld [vmem:[%s1 + $0x1e0] sm:$0xf]
  %v175 = vld [vmem:[%s1 + $0x1e4] sm:$0xf]
  %v176 = vld [vmem:[%s1 + $0x1e8] sm:$0xf]
  %v177 = vld [vmem:[%s1 + $0x1ec] sm:$0xf]
  %v178 = vld [vmem:[%s1 + $0x1f0] sm:$0xf]
  %v179 = vld [vmem:[%s1 + $0x1f4] sm:$0xf]
  %v180 = vld [vmem:[%s1 + $0x1f8] sm:$0xf]
  %v181 = vld [vmem:[%s1 + $0x1fc] sm:$0xf]
  %v182 = vld [vmem:[%s1 + $0x200] sm:$0xf]
  %v183 = vld [vmem:[%s1 + $0x204] sm:$0xf]
  %v184 = vld [vmem:[%s1 + $0x208] sm:$0xf]
  %v185 = vld [vmem:[%s1 + $0x20c] sm:$0xf]
  %v186 = vld [vmem:[%s1 + $0x210] sm:$0xf]
  %v187 = vld [vmem:[%s1 + $0x214] sm:$0xf]
  %v188 = vld [vmem:[%s1 + $0x218] sm:$0xf]
  %v189 = vld [vmem:[%s1 + $0x21c] sm:$0xf]
  %v190 = vld [vmem:[%s1 + $0x220] sm:$0xf]
  %v191 = vld [vmem:[%s1 + $0x224] sm:$0xf]
  %v192 = vld [vmem:[%s1 + $0x228] sm:$0xf]
  %v193 = vld [vmem:[%s1 + $0x22c] sm:$0xf]
  %v194 = vld [vmem:[%s1 + $0x230] sm:$0xf]
  %v195 = vld [vmem:[%s1 + $0x234] sm:$0xf]
  %v196 = vld [vmem:[%s1 + $0x238] sm:$0xf]
  %v197 = vld [vmem:[%s1 + $0x23c] sm:$0xf]
  %v198 = vld [vmem:[%s2] sm:$0x1]
  %v200 = vperm.slane %v198, 0
  %v242 = vunpack.c.l.b16 %v14
  %v243 = vunpack.c.h.b16 %v14
  %v244 = vunpack.c.l.b16 %v15
  %v245 = vunpack.c.h.b16 %v15
  %v246 = vunpack.c.l.b16 %v16
  %v247 = vunpack.c.h.b16 %v16
  %v248 = vunpack.c.l.b16 %v17
  %v249 = vunpack.c.h.b16 %v17
  %v250 = vunpack.c.l.b16 %v18
  %v251 = vunpack.c.l.b16 %v19
  %v252 = vunpack.c.h.b16 %v19
  %v253 = vunpack.c.l.b16 %v20
  %v254 = vunpack.c.h.b16 %v20
  %v255 = vunpack.c.l.b16 %v21
  %v256 = vunpack.c.h.b16 %v21
  %v257 = vunpack.c.l.b16 %v22
  %v258 = vunpack.c.h.b16 %v22
  %v259 = vunpack.c.l.b16 %v23
  %v260 = vunpack.c.l.b16 %v24
  %v261 = vunpack.c.h.b16 %v24
  %v262 = vunpack.c.l.b16 %v25
  %v263 = vunpack.c.h.b16 %v25
  %v264 = vunpack.c.l.b16 %v26
  %v265 = vunpack.c.h.b16 %v26
  %v266 = vunpack.c.l.b16 %v27
  %v267 = vunpack.c.h.b16 %v27
  %v268 = vunpack.c.l.b16 %v28
  %v269 = vunpack.c.l.b16 %v29
  %v270 = vunpack.c.h.b16 %v29
  %v271 = vunpack.c.l.b16 %v30
  %v272 = vunpack.c.h.b16 %v30
  %v273 = vunpack.c.l.b16 %v31
  %v274 = vunpack.c.h.b16 %v31
  %v275 = vunpack.c.l.b16 %v32
  %v276 = vunpack.c.h.b16 %v32
  %v277 = vunpack.c.l.b16 %v33
  %v278 = vunpack.c.l.b16 %v34
  %v279 = vunpack.c.h.b16 %v34
  %v280 = vunpack.c.l.b16 %v35
  %v281 = vunpack.c.h.b16 %v35
  %v282 = vunpack.c.l.b16 %v36
  %v283 = vunpack.c.h.b16 %v36
  %v284 = vunpack.c.l.b16 %v37
  %v285 = vunpack.c.h.b16 %v37
  %v286 = vunpack.c.l.b16 %v38
  %v287 = vunpack.c.l.b16 %v39
  %v288 = vunpack.c.h.b16 %v39
  %v289 = vunpack.c.l.b16 %v40
  %v290 = vunpack.c.h.b16 %v40
  %v291 = vunpack.c.l.b16 %v41
  %v292 = vunpack.c.h.b16 %v41
  %v293 = vunpack.c.l.b16 %v42
  %v294 = vunpack.c.h.b16 %v42
  %v295 = vunpack.c.l.b16 %v43
  %v296 = vunpack.c.l.b16 %v44
  %v297 = vunpack.c.h.b16 %v44
  %v298 = vunpack.c.l.b16 %v45
  %v299 = vunpack.c.h.b16 %v45
  %v300 = vunpack.c.l.b16 %v46
  %v301 = vunpack.c.h.b16 %v46
  %v302 = vunpack.c.l.b16 %v47
  %v303 = vunpack.c.h.b16 %v47
  %v304 = vunpack.c.l.b16 %v48
  %v305 = vunpack.c.l.b16 %v49
  %v306 = vunpack.c.h.b16 %v49
  %v307 = vunpack.c.l.b16 %v50
  %v308 = vunpack.c.h.b16 %v50
  %v309 = vunpack.c.l.b16 %v51
  %v310 = vunpack.c.h.b16 %v51
  %v311 = vunpack.c.l.b16 %v52
  %v312 = vunpack.c.h.b16 %v52
  %v313 = vunpack.c.l.b16 %v53
  %v314 = vpack.c.b16 %v251, %v242
  %v315 = vpack.c.b16 %v252, %v243
  %v316 = vpack.c.b16 %v253, %v244
  %v317 = vpack.c.b16 %v254, %v245
  %v318 = vpack.c.b16 %v255, %v246
  %v319 = vpack.c.b16 %v256, %v247
  %v320 = vpack.c.b16 %v257, %v248
  %v321 = vpack.c.b16 %v258, %v249
  %v322 = vpack.c.b16 %v259, %v250
  %v323 = vpack.c.b16 %v269, %v260
  %v324 = vpack.c.b16 %v270, %v261
  %v325 = vpack.c.b16 %v271, %v262
  %v326 = vpack.c.b16 %v272, %v263
  %v327 = vpack.c.b16 %v273, %v264
  %v328 = vpack.c.b16 %v274, %v265
  %v329 = vpack.c.b16 %v275, %v266
  %v330 = vpack.c.b16 %v276, %v267
  %v331 = vpack.c.b16 %v277, %v268
  %v332 = vpack.c.b16 %v287, %v278
  %v333 = vpack.c.b16 %v288, %v279
  %v334 = vpack.c.b16 %v289, %v280
  %v335 = vpack.c.b16 %v290, %v281
  %v336 = vpack.c.b16 %v291, %v282
  %v337 = vpack.c.b16 %v292, %v283
  %v338 = vpack.c.b16 %v293, %v284
  %v339 = vpack.c.b16 %v294, %v285
  %v340 = vpack.c.b16 %v295, %v286
  %v341 = vpack.c.b16 %v305, %v296
  %v342 = vpack.c.b16 %v306, %v297
  %v343 = vpack.c.b16 %v307, %v298
  %v344 = vpack.c.b16 %v308, %v299
  %v345 = vpack.c.b16 %v309, %v300
  %v346 = vpack.c.b16 %v310, %v301
  %v347 = vpack.c.b16 %v311, %v302
  %v348 = vpack.c.b16 %v312, %v303
  %v349 = vpack.c.b16 %v313, %v304
  %v530 = vunpack.c.l.b16 %v54
  %v531 = vunpack.c.l.b16 %v55
  %v532 = vunpack.c.l.b16 %v56
  %v533 = vunpack.c.l.b16 %v57
  %v534 = vunpack.c.l.b16 %v58
  %v535 = vunpack.c.l.b16 %v59
  %v536 = vunpack.c.l.b16 %v60
  %v537 = vunpack.c.l.b16 %v61
  %v538 = vunpack.c.l.b16 %v62
  %v539 = vunpack.c.l.b16 %v63
  %v540 = vunpack.c.l.b16 %v64
  %v541 = vunpack.c.l.b16 %v65
  %v542 = vunpack.c.l.b16 %v66
  %v543 = vunpack.c.l.b16 %v67
  %v544 = vunpack.c.l.b16 %v68
  %v545 = vunpack.c.l.b16 %v69
  %v546 = vunpack.c.l.b16 %v70
  %v547 = vunpack.c.l.b16 %v71
  %v548 = vunpack.c.l.b16 %v72
  %v549 = vunpack.c.l.b16 %v73
  %v550 = vunpack.c.l.b16 %v74
  %v551 = vunpack.c.l.b16 %v75
  %v552 = vunpack.c.l.b16 %v76
  %v553 = vunpack.c.l.b16 %v77
  %v554 = vunpack.c.l.b16 %v78
  %v555 = vunpack.c.l.b16 %v79
  %v556 = vunpack.c.l.b16 %v80
  %v557 = vunpack.c.l.b16 %v81
  %v558 = vunpack.c.l.b16 %v82
  %v559 = vunpack.c.l.b16 %v83
  %v560 = vunpack.c.l.b16 %v84
  %v561 = vunpack.c.l.b16 %v85
  %v562 = vunpack.c.l.b16 %v86
  %v563 = vunpack.c.l.b16 %v87
  %v564 = vunpack.c.l.b16 %v88
  %v565 = vunpack.c.l.b16 %v89
  %v566 = vunpack.c.l.b16 %v90
  %v567 = vunpack.c.l.b16 %v91
  %v568 = vunpack.c.l.b16 %v92
  %v569 = vunpack.c.l.b16 %v93
  %v570 = vunpack.c.l.b16 %v94
  %v571 = vunpack.c.l.b16 %v95
  %v572 = vunpack.c.l.b16 %v96
  %v573 = vunpack.c.l.b16 %v97
  %v574 = vunpack.c.l.b16 %v98
  %v575 = vunpack.c.l.b16 %v99
  %v576 = vunpack.c.l.b16 %v100
  %v577 = vunpack.c.l.b16 %v101
  %v578 = vunpack.c.l.b16 %v102
  %v579 = vunpack.c.l.b16 %v103
  %v580 = vunpack.c.l.b16 %v104
  %v581 = vunpack.c.l.b16 %v105
  %v582 = vunpack.c.l.b16 %v106
  %v583 = vunpack.c.l.b16 %v107
  %v584 = vunpack.c.l.b16 %v108
  %v585 = vunpack.c.l.b16 %v109
  %v586 = vunpack.c.l.b16 %v110
  %v587 = vunpack.c.l.b16 %v111
  %v588 = vunpack.c.l.b16 %v112
  %v589 = vunpack.c.l.b16 %v113
  %v590 = vunpack.c.l.b16 %v114
  %v591 = vunpack.c.l.b16 %v115
  %v592 = vunpack.c.l.b16 %v116
  %v593 = vunpack.c.l.b16 %v117
  %v594 = vunpack.c.l.b16 %v118
  %v595 = vunpack.c.l.b16 %v119
  %v596 = vunpack.c.l.b16 %v120
  %v597 = vunpack.c.l.b16 %v121
  %v598 = vunpack.c.l.b16 %v122
  %v599 = vunpack.c.l.b16 %v123
  %v600 = vunpack.c.l.b16 %v124
  %v601 = vunpack.c.l.b16 %v125
  %v602 = vunpack.c.l.b16 %v126
  %v603 = vunpack.c.l.b16 %v127
  %v604 = vunpack.c.l.b16 %v128
  %v605 = vunpack.c.l.b16 %v129
  %v606 = vunpack.c.l.b16 %v130
  %v607 = vunpack.c.l.b16 %v131
  %v608 = vunpack.c.l.b16 %v132
  %v609 = vunpack.c.l.b16 %v133
  %v610 = vunpack.c.l.b16 %v134
  %v611 = vunpack.c.l.b16 %v135
  %v612 = vunpack.c.l.b16 %v136
  %v613 = vunpack.c.l.b16 %v137
  %v614 = vunpack.c.l.b16 %v138
  %v615 = vunpack.c.l.b16 %v139
  %v616 = vunpack.c.l.b16 %v140
  %v617 = vunpack.c.l.b16 %v141
  %v618 = vunpack.c.l.b16 %v142
  %v619 = vunpack.c.l.b16 %v143
  %v620 = vunpack.c.l.b16 %v144
  %v621 = vunpack.c.l.b16 %v145
  %v622 = vunpack.c.l.b16 %v146
  %v623 = vunpack.c.l.b16 %v147
  %v624 = vunpack.c.l.b16 %v148
  %v625 = vunpack.c.l.b16 %v149
  %v626 = vunpack.c.l.b16 %v150
  %v627 = vunpack.c.l.b16 %v151
  %v628 = vunpack.c.l.b16 %v152
  %v629 = vunpack.c.l.b16 %v153
  %v630 = vunpack.c.l.b16 %v154
  %v631 = vunpack.c.l.b16 %v155
  %v632 = vunpack.c.l.b16 %v156
  %v633 = vunpack.c.l.b16 %v157
  %v634 = vunpack.c.l.b16 %v158
  %v635 = vunpack.c.l.b16 %v159
  %v636 = vunpack.c.l.b16 %v160
  %v637 = vunpack.c.l.b16 %v161
  %v638 = vunpack.c.l.b16 %v162
  %v639 = vunpack.c.l.b16 %v163
  %v640 = vunpack.c.l.b16 %v164
  %v641 = vunpack.c.l.b16 %v165
  %v642 = vunpack.c.l.b16 %v166
  %v643 = vunpack.c.l.b16 %v167
  %v644 = vunpack.c.l.b16 %v168
  %v645 = vunpack.c.l.b16 %v169
  %v646 = vunpack.c.l.b16 %v170
  %v647 = vunpack.c.l.b16 %v171
  %v648 = vunpack.c.l.b16 %v172
  %v649 = vunpack.c.l.b16 %v173
  %v650 = vunpack.c.l.b16 %v174
  %v651 = vunpack.c.l.b16 %v175
  %v652 = vunpack.c.l.b16 %v176
  %v653 = vunpack.c.l.b16 %v177
  %v654 = vunpack.c.l.b16 %v178
  %v655 = vunpack.c.l.b16 %v179
  %v656 = vunpack.c.l.b16 %v180
  %v657 = vunpack.c.l.b16 %v181
  %v658 = vunpack.c.l.b16 %v182
  %v659 = vunpack.c.l.b16 %v183
  %v660 = vunpack.c.l.b16 %v184
  %v661 = vunpack.c.l.b16 %v185
  %v662 = vunpack.c.l.b16 %v186
  %v663 = vunpack.c.l.b16 %v187
  %v664 = vunpack.c.l.b16 %v188
  %v665 = vunpack.c.l.b16 %v189
  %v666 = vunpack.c.l.b16 %v190
  %v667 = vunpack.c.l.b16 %v191
  %v668 = vunpack.c.l.b16 %v192
  %v669 = vunpack.c.l.b16 %v193
  %v670 = vunpack.c.l.b16 %v194
  %v671 = vunpack.c.l.b16 %v195
  %v672 = vunpack.c.l.b16 %v196
  %v673 = vunpack.c.l.b16 %v197
  %v674 = vpack.c.b16 %v531, %v530
  %v675 = vpack.c.b16 %v533, %v532
  %v676 = vpack.c.b16 %v535, %v534
  %v677 = vpack.c.b16 %v537, %v536
  %v678 = vpack.c.b16 %v539, %v538
  %v679 = vpack.c.b16 %v541, %v540
  %v680 = vpack.c.b16 %v543, %v542
  %v681 = vpack.c.b16 %v545, %v544
  %v682 = vpack.c.b16 %v547, %v546
  %v683 = vpack.c.b16 %v549, %v548
  %v684 = vpack.c.b16 %v551, %v550
  %v685 = vpack.c.b16 %v553, %v552
  %v686 = vpack.c.b16 %v555, %v554
  %v687 = vpack.c.b16 %v557, %v556
  %v688 = vpack.c.b16 %v559, %v558
  %v689 = vpack.c.b16 %v561, %v560
  %v690 = vpack.c.b16 %v563, %v562
  %v691 = vpack.c.b16 %v565, %v564
  %v692 = vpack.c.b16 %v567, %v566
  %v693 = vpack.c.b16 %v569, %v568
  %v694 = vpack.c.b16 %v571, %v570
  %v695 = vpack.c.b16 %v573, %v572
  %v696 = vpack.c.b16 %v575, %v574
  %v697 = vpack.c.b16 %v577, %v576
  %v698 = vpack.c.b16 %v579, %v578
  %v699 = vpack.c.b16 %v581, %v580
  %v700 = vpack.c.b16 %v583, %v582
  %v701 = vpack.c.b16 %v585, %v584
  %v702 = vpack.c.b16 %v587, %v586
  %v703 = vpack.c.b16 %v589, %v588
  %v704 = vpack.c.b16 %v591, %v590
  %v705 = vpack.c.b16 %v593, %v592
  %v706 = vpack.c.b16 %v595, %v594
  %v707 = vpack.c.b16 %v597, %v596
  %v708 = vpack.c.b16 %v599, %v598
  %v709 = vpack.c.b16 %v601, %v600
  %v710 = vpack.c.b16 %v603, %v602
  %v711 = vpack.c.b16 %v605, %v604
  %v712 = vpack.c.b16 %v607, %v606
  %v713 = vpack.c.b16 %v609, %v608
  %v714 = vpack.c.b16 %v611, %v610
  %v715 = vpack.c.b16 %v613, %v612
  %v716 = vpack.c.b16 %v615, %v614
  %v717 = vpack.c.b16 %v617, %v616
  %v718 = vpack.c.b16 %v619, %v618
  %v719 = vpack.c.b16 %v621, %v620
  %v720 = vpack.c.b16 %v623, %v622
  %v721 = vpack.c.b16 %v625, %v624
  %v722 = vpack.c.b16 %v627, %v626
  %v723 = vpack.c.b16 %v629, %v628
  %v724 = vpack.c.b16 %v631, %v630
  %v725 = vpack.c.b16 %v633, %v632
  %v726 = vpack.c.b16 %v635, %v634
  %v727 = vpack.c.b16 %v637, %v636
  %v728 = vpack.c.b16 %v639, %v638
  %v729 = vpack.c.b16 %v641, %v640
  %v730 = vpack.c.b16 %v643, %v642
  %v731 = vpack.c.b16 %v645, %v644
  %v732 = vpack.c.b16 %v647, %v646
  %v733 = vpack.c.b16 %v649, %v648
  %v734 = vpack.c.b16 %v651, %v650
  %v735 = vpack.c.b16 %v653, %v652
  %v736 = vpack.c.b16 %v655, %v654
  %v737 = vpack.c.b16 %v657, %v656
  %v738 = vpack.c.b16 %v659, %v658
  %v739 = vpack.c.b16 %v661, %v660
  %v740 = vpack.c.b16 %v663, %v662
  %v741 = vpack.c.b16 %v665, %v664
  %v742 = vpack.c.b16 %v667, %v666
  %v743 = vpack.c.b16 %v669, %v668
  %v744 = vpack.c.b16 %v671, %v670
  %v745 = vpack.c.b16 %v673, %v672
  %818 = vmatpush.bf16.msra.mxu0 %v681
  %819 = vmatpush.bf16.msra.mxu0 %v680
  %820 = vmatpush.bf16.msra.mxu0 %v679
  %821 = vmatpush.bf16.msra.mxu0 %v678
  %822 = vmatpush.bf16.msra.mxu0 %v677
  %823 = vmatpush.bf16.msra.mxu0 %v676
  %824 = vmatpush.bf16.msra.mxu0 %v675
  %825 = vmatpush.bf16.msra.mxu0 %v674
  %826 = vmatmul.bf16.gmra.mxu0 %v314
  %v827 = vpop.f32.mrf.mxu0
  %v828 = vadd.f32 %v200, %v827
  %v829 = vpop.f32.mrf.mxu0
  %v830 = vadd.f32 %v200, %v829
  %831 = vmatmul.bf16.gmra.mxu0 %v323
  %v832 = vpop.f32.mrf.mxu0
  %v833 = vadd.f32 %v200, %v832
  %v834 = vpop.f32.mrf.mxu0
  %v835 = vadd.f32 %v200, %v834
  %836 = vmatmul.bf16.gmra.mxu0 %v332
  %v837 = vpop.f32.mrf.mxu0
  %v838 = vadd.f32 %v200, %v837
  %v839 = vpop.f32.mrf.mxu0
  %v840 = vadd.f32 %v200, %v839
  %841 = vmatmul.bf16.gmra.mxu0 %v341
  %v842 = vpop.f32.mrf.mxu0
  %v843 = vadd.f32 %v200, %v842
  %v844 = vpop.f32.mrf.mxu0
  %v845 = vadd.f32 %v200, %v844
  %846 = vdwg.mxu0
  %847 = vmatpush.bf16.msra.mxu0 %v689
  %848 = vmatpush.bf16.msra.mxu0 %v688
  %849 = vmatpush.bf16.msra.mxu0 %v687
  %850 = vmatpush.bf16.msra.mxu0 %v686
  %851 = vmatpush.bf16.msra.mxu0 %v685
  %852 = vmatpush.bf16.msra.mxu0 %v684
  %853 = vmatpush.bf16.msra.mxu0 %v683
  %854 = vmatpush.bf16.msra.mxu0 %v682
  %855 = vmatmul.bf16.gmra.mxu0 %v315
  %v856 = vpop.f32.mrf.mxu0
  %v857 = vadd.f32 %v828, %v856
  %v858 = vpop.f32.mrf.mxu0
  %v859 = vadd.f32 %v830, %v858
  %860 = vmatmul.bf16.gmra.mxu0 %v324
  %v861 = vpop.f32.mrf.mxu0
  %v862 = vadd.f32 %v833, %v861
  %v863 = vpop.f32.mrf.mxu0
  %v864 = vadd.f32 %v835, %v863
  %865 = vmatmul.bf16.gmra.mxu0 %v333
  %v866 = vpop.f32.mrf.mxu0
  %v867 = vadd.f32 %v838, %v866
  %v868 = vpop.f32.mrf.mxu0
  %v869 = vadd.f32 %v840, %v868
  %870 = vmatmul.bf16.gmra.mxu0 %v342
  %v871 = vpop.f32.mrf.mxu0
  %v872 = vadd.f32 %v843, %v871
  %v873 = vpop.f32.mrf.mxu0
  %v874 = vadd.f32 %v845, %v873
  %875 = vdwg.mxu0
  %876 = vmatpush.bf16.msra.mxu0 %v697
  %877 = vmatpush.bf16.msra.mxu0 %v696
  %878 = vmatpush.bf16.msra.mxu0 %v695
  %879 = vmatpush.bf16.msra.mxu0 %v694
  %880 = vmatpush.bf16.msra.mxu0 %v693
  %881 = vmatpush.bf16.msra.mxu0 %v692
  %882 = vmatpush.bf16.msra.mxu0 %v691
  %883 = vmatpush.bf16.msra.mxu0 %v690
  %884 = vmatmul.bf16.gmra.mxu0 %v316
  %v885 = vpop.f32.mrf.mxu0
  %v886 = vadd.f32 %v857, %v885
  %v887 = vpop.f32.mrf.mxu0
  %v888 = vadd.f32 %v859, %v887
  %889 = vmatmul.bf16.gmra.mxu0 %v325
  %v890 = vpop.f32.mrf.mxu0
  %v891 = vadd.f32 %v862, %v890
  %v892 = vpop.f32.mrf.mxu0
  %v893 = vadd.f32 %v864, %v892
  %894 = vmatmul.bf16.gmra.mxu0 %v334
  %v895 = vpop.f32.mrf.mxu0
  %v896 = vadd.f32 %v867, %v895
  %v897 = vpop.f32.mrf.mxu0
  %v898 = vadd.f32 %v869, %v897
  %899 = vmatmul.bf16.gmra.mxu0 %v343
  %v900 = vpop.f32.mrf.mxu0
  %v901 = vadd.f32 %v872, %v900
  %v902 = vpop.f32.mrf.mxu0
  %v903 = vadd.f32 %v874, %v902
  %904 = vdwg.mxu0
  %905 = vmatpush.bf16.msra.mxu0 %v705
  %906 = vmatpush.bf16.msra.mxu0 %v704
  %907 = vmatpush.bf16.msra.mxu0 %v703
  %908 = vmatpush.bf16.msra.mxu0 %v702
  %909 = vmatpush.bf16.msra.mxu0 %v701
  %910 = vmatpush.bf16.msra.mxu0 %v700
  %911 = vmatpush.bf16.msra.mxu0 %v699
  %912 = vmatpush.bf16.msra.mxu0 %v698
  %913 = vmatmul.bf16.gmra.mxu0 %v317
  %v914 = vpop.f32.mrf.mxu0
  %v915 = vadd.f32 %v886, %v914
  %v916 = vpop.f32.mrf.mxu0
  %v917 = vadd.f32 %v888, %v916
  %918 = vmatmul.bf16.gmra.mxu0 %v326
  %v919 = vpop.f32.mrf.mxu0
  %v920 = vadd.f32 %v891, %v919
  %v921 = vpop.f32.mrf.mxu0
  %v922 = vadd.f32 %v893, %v921
  %923 = vmatmul.bf16.gmra.mxu0 %v335
  %v924 = vpop.f32.mrf.mxu0
  %v925 = vadd.f32 %v896, %v924
  %v926 = vpop.f32.mrf.mxu0
  %v927 = vadd.f32 %v898, %v926
  %928 = vmatmul.bf16.gmra.mxu0 %v344
  %v929 = vpop.f32.mrf.mxu0
  %v930 = vadd.f32 %v901, %v929
  %v931 = vpop.f32.mrf.mxu0
  %v932 = vadd.f32 %v903, %v931
  %933 = vdwg.mxu0
  %934 = vmatpush.bf16.msra.mxu0 %v713
  %935 = vmatpush.bf16.msra.mxu0 %v712
  %936 = vmatpush.bf16.msra.mxu0 %v711
  %937 = vmatpush.bf16.msra.mxu0 %v710
  %938 = vmatpush.bf16.msra.mxu0 %v709
  %939 = vmatpush.bf16.msra.mxu0 %v708
  %940 = vmatpush.bf16.msra.mxu0 %v707
  %941 = vmatpush.bf16.msra.mxu0 %v706
  %942 = vmatmul.bf16.gmra.mxu0 %v318
  %v943 = vpop.f32.mrf.mxu0
  %v944 = vadd.f32 %v915, %v943
  %v945 = vpop.f32.mrf.mxu0
  %v946 = vadd.f32 %v917, %v945
  %947 = vmatmul.bf16.gmra.mxu0 %v327
  %v948 = vpop.f32.mrf.mxu0
  %v949 = vadd.f32 %v920, %v948
  %v950 = vpop.f32.mrf.mxu0
  %v951 = vadd.f32 %v922, %v950
  %952 = vmatmul.bf16.gmra.mxu0 %v336
  %v953 = vpop.f32.mrf.mxu0
  %v954 = vadd.f32 %v925, %v953
  %v955 = vpop.f32.mrf.mxu0
  %v956 = vadd.f32 %v927, %v955
  %957 = vmatmul.bf16.gmra.mxu0 %v345
  %v958 = vpop.f32.mrf.mxu0
  %v959 = vadd.f32 %v930, %v958
  %v960 = vpop.f32.mrf.mxu0
  %v961 = vadd.f32 %v932, %v960
  %962 = vdwg.mxu0
  %963 = vmatpush.bf16.msra.mxu0 %v721
  %964 = vmatpush.bf16.msra.mxu0 %v720
  %965 = vmatpush.bf16.msra.mxu0 %v719
  %966 = vmatpush.bf16.msra.mxu0 %v718
  %967 = vmatpush.bf16.msra.mxu0 %v717
  %968 = vmatpush.bf16.msra.mxu0 %v716
  %969 = vmatpush.bf16.msra.mxu0 %v715
  %970 = vmatpush.bf16.msra.mxu0 %v714
  %971 = vmatmul.bf16.gmra.mxu0 %v319
  %v972 = vpop.f32.mrf.mxu0
  %v973 = vadd.f32 %v944, %v972
  %v974 = vpop.f32.mrf.mxu0
  %v975 = vadd.f32 %v946, %v974
  %976 = vmatmul.bf16.gmra.mxu0 %v328
  %v977 = vpop.f32.mrf.mxu0
  %v978 = vadd.f32 %v949, %v977
  %v979 = vpop.f32.mrf.mxu0
  %v980 = vadd.f32 %v951, %v979
  %981 = vmatmul.bf16.gmra.mxu0 %v337
  %v982 = vpop.f32.mrf.mxu0
  %v983 = vadd.f32 %v954, %v982
  %v984 = vpop.f32.mrf.mxu0
  %v985 = vadd.f32 %v956, %v984
  %986 = vmatmul.bf16.gmra.mxu0 %v346
  %v987 = vpop.f32.mrf.mxu0
  %v988 = vadd.f32 %v959, %v987
  %v989 = vpop.f32.mrf.mxu0
  %v990 = vadd.f32 %v961, %v989
  %991 = vdwg.mxu0
  %992 = vmatpush.bf16.msra.mxu0 %v729
  %993 = vmatpush.bf16.msra.mxu0 %v728
  %994 = vmatpush.bf16.msra.mxu0 %v727
  %995 = vmatpush.bf16.msra.mxu0 %v726
  %996 = vmatpush.bf16.msra.mxu0 %v725
  %997 = vmatpush.bf16.msra.mxu0 %v724
  %998 = vmatpush.bf16.msra.mxu0 %v723
  %999 = vmatpush.bf16.msra.mxu0 %v722
  %1000 = vmatmul.bf16.gmra.mxu0 %v320
  %v1001 = vpop.f32.mrf.mxu0
  %v1002 = vadd.f32 %v973, %v1001
  %v1003 = vpop.f32.mrf.mxu0
  %v1004 = vadd.f32 %v975, %v1003
  %1005 = vmatmul.bf16.gmra.mxu0 %v329
  %v1006 = vpop.f32.mrf.mxu0
  %v1007 = vadd.f32 %v978, %v1006
  %v1008 = vpop.f32.mrf.mxu0
  %v1009 = vadd.f32 %v980, %v1008
  %1010 = vmatmul.bf16.gmra.mxu0 %v338
  %v1011 = vpop.f32.mrf.mxu0
  %v1012 = vadd.f32 %v983, %v1011
  %v1013 = vpop.f32.mrf.mxu0
  %v1014 = vadd.f32 %v985, %v1013
  %1015 = vmatmul.bf16.gmra.mxu0 %v347
  %v1016 = vpop.f32.mrf.mxu0
  %v1017 = vadd.f32 %v988, %v1016
  %v1018 = vpop.f32.mrf.mxu0
  %v1019 = vadd.f32 %v990, %v1018
  %1020 = vdwg.mxu0
  %1021 = vmatpush.bf16.msra.mxu0 %v737
  %1022 = vmatpush.bf16.msra.mxu0 %v736
  %1023 = vmatpush.bf16.msra.mxu0 %v735
  %1024 = vmatpush.bf16.msra.mxu0 %v734
  %1025 = vmatpush.bf16.msra.mxu0 %v733
  %1026 = vmatpush.bf16.msra.mxu0 %v732
  %1027 = vmatpush.bf16.msra.mxu0 %v731
  %1028 = vmatpush.bf16.msra.mxu0 %v730
  %1029 = vmatmul.bf16.gmra.mxu0 %v321
  %v1030 = vpop.f32.mrf.mxu0
  %v1031 = vadd.f32 %v1002, %v1030
  %v1032 = vpop.f32.mrf.mxu0
  %v1033 = vadd.f32 %v1004, %v1032
  %1034 = vmatmul.bf16.gmra.mxu0 %v330
  %v1035 = vpop.f32.mrf.mxu0
  %v1036 = vadd.f32 %v1007, %v1035
  %v1037 = vpop.f32.mrf.mxu0
  %v1038 = vadd.f32 %v1009, %v1037
  %1039 = vmatmul.bf16.gmra.mxu0 %v339
  %v1040 = vpop.f32.mrf.mxu0
  %v1041 = vadd.f32 %v1012, %v1040
  %v1042 = vpop.f32.mrf.mxu0
  %v1043 = vadd.f32 %v1014, %v1042
  %1044 = vmatmul.bf16.gmra.mxu0 %v348
  %v1045 = vpop.f32.mrf.mxu0
  %v1046 = vadd.f32 %v1017, %v1045
  %v1047 = vpop.f32.mrf.mxu0
  %v1048 = vadd.f32 %v1019, %v1047
  %1049 = vdwg.mxu0
  %1050 = vmatpush.bf16.msra.mxu0 %v745
  %1051 = vmatpush.bf16.msra.mxu0 %v744
  %1052 = vmatpush.bf16.msra.mxu0 %v743
  %1053 = vmatpush.bf16.msra.mxu0 %v742
  %1054 = vmatpush.bf16.msra.mxu0 %v741
  %1055 = vmatpush.bf16.msra.mxu0 %v740
  %1056 = vmatpush.bf16.msra.mxu0 %v739
  %1057 = vmatpush.bf16.msra.mxu0 %v738
  %1058 = vmatmul.bf16.gmra.mxu0 %v322
  %v1059 = vpop.f32.mrf.mxu0
  %v1060 = vadd.f32 %v1031, %v1059
  %v1061 = vpop.f32.mrf.mxu0
  %v1062 = vadd.f32 %v1033, %v1061
  %1063 = vmatmul.bf16.gmra.mxu0 %v331
  %v1064 = vpop.f32.mrf.mxu0
  %v1065 = vadd.f32 %v1036, %v1064
  %v1066 = vpop.f32.mrf.mxu0
  %v1067 = vadd.f32 %v1038, %v1066
  %1068 = vmatmul.bf16.gmra.mxu0 %v340
  %v1069 = vpop.f32.mrf.mxu0
  %v1070 = vadd.f32 %v1041, %v1069
  %v1071 = vpop.f32.mrf.mxu0
  %v1072 = vadd.f32 %v1043, %v1071
  %1073 = vmatmul.bf16.gmra.mxu0 %v349
  %v1074 = vpop.f32.mrf.mxu0
  %v1075 = vadd.f32 %v1046, %v1074
  %v1076 = vpop.f32.mrf.mxu0
  %v1077 = vadd.f32 %v1048, %v1076
  %1078 = vdwg.mxu0
  %v1079 = vmax.f32 %v1060, 0.0
  %v1080 = vmax.f32 %v1062, 0.0
  %v1081 = vmax.f32 %v1065, 0.0
  %v1082 = vmax.f32 %v1067, 0.0
  %v1083 = vmax.f32 %v1070, 0.0
  %v1084 = vmax.f32 %v1072, 0.0
  %v1085 = vmax.f32 %v1075, 0.0
  %v1086 = vmax.f32 %v1077, 0.0
  %v1087 = vpack.c.bf16 %v1079, %v1079
  %v1088 = vpack.c.bf16 %v1080, %v1080
  %v1089 = vpack.c.bf16 %v1081, %v1081
  %v1090 = vpack.c.bf16 %v1082, %v1082
  %v1091 = vpack.c.bf16 %v1083, %v1083
  %v1092 = vpack.c.bf16 %v1084, %v1084
  %v1093 = vpack.c.bf16 %v1085, %v1085
  %v1094 = vpack.c.bf16 %v1086, %v1086
  %1095 = vst [vmem:[%s3] sm:$0xf] %v1087
  %1096 = vst [vmem:[%s3 + $0x4] sm:$0xf] %v1088
  %1097 = vst [vmem:[%s3 + $0x8] sm:$0xf] %v1089
  %1098 = vst [vmem:[%s3 + $0xc] sm:$0xf] %v1090
  %1099 = vst [vmem:[%s3 + $0x10] sm:$0xf] %v1091
  %1100 = vst [vmem:[%s3 + $0x14] sm:$0xf] %v1092
  %1101 = vst [vmem:[%s3 + $0x18] sm:$0xf] %v1093
  %1102 = vst [vmem:[%s3 + $0x1c] sm:$0xf] %v1094
  // Predicated region
  $region14: #{_lambda_.5} parent=0 // pred_check
    _
  $region15: #{_lambda_.5} parent=0 // pred_check_branch
    %1104 = sbr.rel (0) target = $region17
  $region16: #{_lambda_.5} parent=0 // pred_region
    _
  $region17: #{_lambda_.5} parent=0 // pred_fallthru
    _
  // Predicated region
  $region18: #{_lambda_.5} parent=0 // pred_check
    _
  $region19: #{_lambda_.5} parent=0 // pred_check_branch
    %1106 = sbr.rel (0) target = $region21
  $region20: #{_lambda_.5} parent=0 // pred_region
    _
  $region21: #{_lambda_.5} parent=0 // pred_fallthru
    _

// kernel: _lambda_.7
$region0: #{_lambda_.7}
  #allocation0 [shape = 'u32[]', space=smem, size = 0x4, offset = 0x4, fixed_abs, tag = 'smem constant byte address 0x4 - core index']
  #allocation1 [shape = 'u32[72,128]{1,0:T(1,128)}', space=vmem, size = 0x9000, scoped, tag = 'internal scratch']
  %s0 = inlined_call_operand.vmem [shape: bf16[2,25,128], index: 0, kind: input, shape index: {}]
  %s1 = inlined_call_operand.vmem [shape: bf16[128,512], index: 1, kind: input, shape index: {}]
  %s2 = inlined_call_operand.vmem [shape: f32[1,512], index: 2, kind: input, shape index: {}]
  %s3 = inlined_call_operand.hbm [shape: f32[2,512], index: 3, kind: output, shape index: {}]
  %s4 = sld [smem:[#allocation0]]
  $region22: #{_lambda_.7} parent=0
    _
  %s6 = ssub.s32 1, %s4
  %s7 = scalar_select 0, %s6, %s4
  $region1: #{_lambda_.7} parent=0
    #allocation2 [shape = 'u8[4096]{0}', space=vmem, size = 0x1000, scoped, tag = 'output window, operand 0, single buffered']
    #allocation3 [shape = 's32[1]{0}', space=sflag, size = 0x4, scoped, tag = 'scoped memory for _lambda_.7']
    %8 = vsyncpa [#allocation3], 0
    // Predicated region
    $region2: #{_lambda_.7} parent=1 // pred_check
      _
    $region3: #{_lambda_.7} parent=1 // pred_check_branch
      %10 = sbr.rel (0) target = $region5
    $region4: #{_lambda_.7} parent=1 // pred_region
      _
    $region5: #{_lambda_.7} parent=1 // pred_fallthru
      _
    // Predicated region
    $region6: #{_lambda_.7} parent=1 // pred_check
      _
    $region7: #{_lambda_.7} parent=1 // pred_check_branch
      %12 = sbr.rel (0) target = $region9
    $region8: #{_lambda_.7} parent=1 // pred_region
      _
    $region9: #{_lambda_.7} parent=1 // pred_fallthru
      _
    // Predicated region
    $region10: #{_lambda_.7} parent=1 // pred_check
      _
    $region11: #{_lambda_.7} parent=1 // pred_check_branch
      %14 = sbr.rel (0) target = $region13
    $region12: #{_lambda_.7} parent=1 // pred_region
      _
    $region13: #{_lambda_.7} parent=1 // pred_fallthru
      _
    %v15 = vld [vmem:[%s0] sm:$0xf]
    %v16 = vld [vmem:[%s0 + $0x4] sm:$0xf]
    %v17 = vld [vmem:[%s0 + $0x8] sm:$0xf]
    %v18 = vld [vmem:[%s0 + $0xc] sm:$0x1]
    %v19 = vld [vmem:[%s0 + $0x10] sm:$0xf]
    %v20 = vld [vmem:[%s0 + $0x14] sm:$0xf]
    %v21 = vld [vmem:[%s0 + $0x18] sm:$0xf]
    %v22 = vld [vmem:[%s0 + $0x1c] sm:$0x1]
    %v23 = vunpack.c.l.bf16 %v15
    %v24 = vunpack.c.l.bf16 %v16
    %v25 = vunpack.c.l.bf16 %v17
    %v26 = vunpack.c.l.bf16 %v18
    %v27 = vunpack.c.l.bf16 %v19
    %v28 = vunpack.c.l.bf16 %v20
    %v29 = vunpack.c.l.bf16 %v21
    %v30 = vunpack.c.l.bf16 %v22
    %v31 = vadd.f32 %v23, %v24
    %v32 = vadd.f32 %v31, %v25
    %vm33 = vcmask 1040384
    %v34 = vsel %vm33, %v26, 0.0
    %v35 = vadd.f32 %v32, %v34
    %v36 = vrot.slane %v35, 4
    %v37 = vadd.f32 %v35, %v36
    %v38 = vrot.slane %v37, 2
    %v39 = vadd.f32 %v37, %v38
    %v40 = vrot.slane %v39, 1
    %v41 = vadd.f32 %v39, %v40
    %v42 = vadd.f32 %v27, %v28
    %v43 = vadd.f32 %v42, %v29
    %v44 = vsel %vm33, %v30, 0.0
    %v45 = vadd.f32 %v43, %v44
    %v46 = vrot.slane %v45, 4
    %v47 = vadd.f32 %v45, %v46
    %v48 = vrot.slane %v47, 2
    %v49 = vadd.f32 %v47, %v48
    %v50 = vrot.slane %v49, 1
    %v51 = vadd.f32 %v49, %v50
    %v52 = vrcp.pop 25.0
    %v53 = vmul.f32 25.0, %v52
    %v54 = vsub.f32 1.0, %v53
    %v55 = vmul.f32 %v52, %v54
    %v56 = vadd.f32 %v52, %v55
    %vm57 = vweird.f32 %v52
    %v58 = vsel %vm57, %v52, %v56
    %v59 = vmul.f32 %v41, %v58
    %v60 = vmul.f32 %v51, %v58
    %v61 = vpack.c.bf16 %v59, %v59
    %v62 = vpack.c.bf16 %v60, %v60
    %v63 = vld [vmem:[%s1] sm:$0xff]
    %v64 = vld [vmem:[%s1 + $0x8] sm:$0xff]
    %v65 = vld [vmem:[%s1 + $0x10] sm:$0xff]
    %v66 = vld [vmem:[%s1 + $0x18] sm:$0xff]
    %v67 = vld [vmem:[%s1 + $0x20] sm:$0xff]
    %v68 = vld [vmem:[%s1 + $0x28] sm:$0xff]
    %v69 = vld [vmem:[%s1 + $0x30] sm:$0xff]
    %v70 = vld [vmem:[%s1 + $0x38] sm:$0xff]
    %v71 = vld [vmem:[%s1 + $0x40] sm:$0xff]
    %v72 = vld [vmem:[%s1 + $0x48] sm:$0xff]
    %v73 = vld [vmem:[%s1 + $0x50] sm:$0xff]
    %v74 = vld [vmem:[%s1 + $0x58] sm:$0xff]
    %v75 = vld [vmem:[%s1 + $0x60] sm:$0xff]
    %v76 = vld [vmem:[%s1 + $0x68] sm:$0xff]
    %v77 = vld [vmem:[%s1 + $0x70] sm:$0xff]
    %v78 = vld [vmem:[%s1 + $0x78] sm:$0xff]
    %v79 = vld [vmem:[%s1 + $0x80] sm:$0xff]
    %v80 = vld [vmem:[%s1 + $0x88] sm:$0xff]
    %v81 = vld [vmem:[%s1 + $0x90] sm:$0xff]
    %v82 = vld [vmem:[%s1 + $0x98] sm:$0xff]
    %v83 = vld [vmem:[%s1 + $0xa0] sm:$0xff]
    %v84 = vld [vmem:[%s1 + $0xa8] sm:$0xff]
    %v85 = vld [vmem:[%s1 + $0xb0] sm:$0xff]
    %v86 = vld [vmem:[%s1 + $0xb8] sm:$0xff]
    %v87 = vld [vmem:[%s1 + $0xc0] sm:$0xff]
    %v88 = vld [vmem:[%s1 + $0xc8] sm:$0xff]
    %v89 = vld [vmem:[%s1 + $0xd0] sm:$0xff]
    %v90 = vld [vmem:[%s1 + $0xd8] sm:$0xff]
    %v91 = vld [vmem:[%s1 + $0xe0] sm:$0xff]
    %v92 = vld [vmem:[%s1 + $0xe8] sm:$0xff]
    %v93 = vld [vmem:[%s1 + $0xf0] sm:$0xff]
    %v94 = vld [vmem:[%s1 + $0xf8] sm:$0xff]
    %v95 = vld [vmem:[%s2] sm:$0xf]
    %v97 = vperm.slane %v95, 0
    %v98 = vperm.slane %v95, 1
    %v99 = vperm.slane %v95, 2
    %v100 = vperm.slane %v95, 3
    %v107 = vunpack.c.l.b16 %v61
    %v108 = vunpack.c.l.b16 %v62
    %vm109 = vcmask 1041409
    %v110 = vsel %vm109, %v108, %v107
    %v111 = vpack.c.b16 %v110, %v110
    %v145 = vunpack.c.l.b16 %v63
    %v146 = vunpack.c.h.b16 %v63
    %v147 = vunpack.c.l.b16 %v64
    %v148 = vunpack.c.h.b16 %v64
    %v149 = vunpack.c.l.b16 %v65
    %v150 = vunpack.c.h.b16 %v65
    %v151 = vunpack.c.l.b16 %v66
    %v152 = vunpack.c.h.b16 %v66
    %v153 = vunpack.c.l.b16 %v67
    %v154 = vunpack.c.h.b16 %v67
    %v155 = vunpack.c.l.b16 %v68
    %v156 = vunpack.c.h.b16 %v68
    %v157 = vunpack.c.l.b16 %v69
    %v158 = vunpack.c.h.b16 %v69
    %v159 = vunpack.c.l.b16 %v70
    %v160 = vunpack.c.h.b16 %v70
    %v161 = vunpack.c.l.b16 %v71
    %v162 = vunpack.c.h.b16 %v71
    %v163 = vunpack.c.l.b16 %v72
    %v164 = vunpack.c.h.b16 %v72
    %v165 = vunpack.c.l.b16 %v73
    %v166 = vunpack.c.h.b16 %v73
    %v167 = vunpack.c.l.b16 %v74
    %v168 = vunpack.c.h.b16 %v74
    %v169 = vunpack.c.l.b16 %v75
    %v170 = vunpack.c.h.b16 %v75
    %v171 = vunpack.c.l.b16 %v76
    %v172 = vunpack.c.h.b16 %v76
    %v173 = vunpack.c.l.b16 %v77
    %v174 = vunpack.c.h.b16 %v77
    %v175 = vunpack.c.l.b16 %v78
    %v176 = vunpack.c.h.b16 %v78
    %v177 = vunpack.c.l.b16 %v79
    %v178 = vunpack.c.h.b16 %v79
    %v179 = vunpack.c.l.b16 %v80
    %v180 = vunpack.c.h.b16 %v80
    %v181 = vunpack.c.l.b16 %v81
    %v182 = vunpack.c.h.b16 %v81
    %v183 = vunpack.c.l.b16 %v82
    %v184 = vunpack.c.h.b16 %v82
    %v185 = vunpack.c.l.b16 %v83
    %v186 = vunpack.c.h.b16 %v83
    %v187 = vunpack.c.l.b16 %v84
    %v188 = vunpack.c.h.b16 %v84
    %v189 = vunpack.c.l.b16 %v85
    %v190 = vunpack.c.h.b16 %v85
    %v191 = vunpack.c.l.b16 %v86
    %v192 = vunpack.c.h.b16 %v86
    %v193 = vunpack.c.l.b16 %v87
    %v194 = vunpack.c.h.b16 %v87
    %v195 = vunpack.c.l.b16 %v88
    %v196 = vunpack.c.h.b16 %v88
    %v197 = vunpack.c.l.b16 %v89
    %v198 = vunpack.c.h.b16 %v89
    %v199 = vunpack.c.l.b16 %v90
    %v200 = vunpack.c.h.b16 %v90
    %v201 = vunpack.c.l.b16 %v91
    %v202 = vunpack.c.h.b16 %v91
    %v203 = vunpack.c.l.b16 %v92
    %v204 = vunpack.c.h.b16 %v92
    %v205 = vunpack.c.l.b16 %v93
    %v206 = vunpack.c.h.b16 %v93
    %v207 = vunpack.c.l.b16 %v94
    %v208 = vunpack.c.h.b16 %v94
    %v209 = vpack.c.b16 %v149, %v145
    %v210 = vpack.c.b16 %v150, %v146
    %v211 = vpack.c.b16 %v151, %v147
    %v212 = vpack.c.b16 %v152, %v148
    %v213 = vpack.c.b16 %v157, %v153
    %v214 = vpack.c.b16 %v158, %v154
    %v215 = vpack.c.b16 %v159, %v155
    %v216 = vpack.c.b16 %v160, %v156
    %v217 = vpack.c.b16 %v165, %v161
    %v218 = vpack.c.b16 %v166, %v162
    %v219 = vpack.c.b16 %v167, %v163
    %v220 = vpack.c.b16 %v168, %v164
    %v221 = vpack.c.b16 %v173, %v169
    %v222 = vpack.c.b16 %v174, %v170
    %v223 = vpack.c.b16 %v175, %v171
    %v224 = vpack.c.b16 %v176, %v172
    %v225 = vpack.c.b16 %v181, %v177
    %v226 = vpack.c.b16 %v182, %v178
    %v227 = vpack.c.b16 %v183, %v179
    %v228 = vpack.c.b16 %v184, %v180
    %v229 = vpack.c.b16 %v189, %v185
    %v230 = vpack.c.b16 %v190, %v186
    %v231 = vpack.c.b16 %v191, %v187
    %v232 = vpack.c.b16 %v192, %v188
    %v233 = vpack.c.b16 %v197, %v193
    %v234 = vpack.c.b16 %v198, %v194
    %v235 = vpack.c.b16 %v199, %v195
    %v236 = vpack.c.b16 %v200, %v196
    %v237 = vpack.c.b16 %v205, %v201
    %v238 = vpack.c.b16 %v206, %v202
    %v239 = vpack.c.b16 %v207, %v203
    %v240 = vpack.c.b16 %v208, %v204
    %273 = vmatpush.bf16.msra.mxu0 %v237
    %274 = vmatpush.bf16.msra.mxu0 %v233
    %275 = vmatpush.bf16.msra.mxu0 %v229
    %276 = vmatpush.bf16.msra.mxu0 %v225
    %277 = vmatpush.bf16.msra.mxu0 %v221
    %278 = vmatpush.bf16.msra.mxu0 %v217
    %279 = vmatpush.bf16.msra.mxu0 %v213
    %280 = vmatpush.bf16.msra.mxu0 %v209
    %281 = vmatmul.bf16.gmra.mxu0 %v111
    %v282 = vpop.f32.mrf.mxu0
    %v283 = vadd.f32 %v97, %v282
    %v284 = vpop.f32.mrf.mxu0
    %285 = vdwg.mxu0
    %286 = vmatpush.bf16.msra.mxu0 %v238
    %287 = vmatpush.bf16.msra.mxu0 %v234
    %288 = vmatpush.bf16.msra.mxu0 %v230
    %289 = vmatpush.bf16.msra.mxu0 %v226
    %290 = vmatpush.bf16.msra.mxu0 %v222
    %291 = vmatpush.bf16.msra.mxu0 %v218
    %292 = vmatpush.bf16.msra.mxu0 %v214
    %293 = vmatpush.bf16.msra.mxu0 %v210
    %294 = vmatmul.bf16.gmra.mxu0 %v111
    %v295 = vpop.f32.mrf.mxu0
    %v296 = vadd.f32 %v98, %v295
    %v297 = vpop.f32.mrf.mxu0
    %298 = vdwg.mxu0
    %299 = vmatpush.bf16.msra.mxu0 %v239
    %300 = vmatpush.bf16.msra.mxu0 %v235
    %301 = vmatpush.bf16.msra.mxu0 %v231
    %302 = vmatpush.bf16.msra.mxu0 %v227
    %303 = vmatpush.bf16.msra.mxu0 %v223
    %304 = vmatpush.bf16.msra.mxu0 %v219
    %305 = vmatpush.bf16.msra.mxu0 %v215
    %306 = vmatpush.bf16.msra.mxu0 %v211
    %307 = vmatmul.bf16.gmra.mxu0 %v111
    %v308 = vpop.f32.mrf.mxu0
    %v309 = vadd.f32 %v99, %v308
    %v310 = vpop.f32.mrf.mxu0
    %311 = vdwg.mxu0
    %312 = vmatpush.bf16.msra.mxu0 %v240
    %313 = vmatpush.bf16.msra.mxu0 %v236
    %314 = vmatpush.bf16.msra.mxu0 %v232
    %315 = vmatpush.bf16.msra.mxu0 %v228
    %316 = vmatpush.bf16.msra.mxu0 %v224
    %317 = vmatpush.bf16.msra.mxu0 %v220
    %318 = vmatpush.bf16.msra.mxu0 %v216
    %319 = vmatpush.bf16.msra.mxu0 %v212
    %320 = vmatmul.bf16.gmra.mxu0 %v111
    %v321 = vpop.f32.mrf.mxu0
    %v322 = vadd.f32 %v100, %v321
    %v323 = vpop.f32.mrf.mxu0
    %324 = vdwg.mxu0
    %v325 = vmul.f32 %v283, %v283
    %v326 = vmul.f32 %v296, %v296
    %v327 = vmul.f32 %v309, %v309
    %v328 = vmul.f32 %v322, %v322
    %vm329 = vcmask 1041408
    %v330 = vsel %vm329, %v325, 0.0
    %v331 = vsel %vm329, %v326, 0.0
    %v332 = vadd.f32 %v330, %v331
    %v333 = vsel %vm329, %v327, 0.0
    %v334 = vadd.f32 %v332, %v333
    %v335 = vsel %vm329, %v328, 0.0
    %v336 = vadd.f32 %v334, %v335
    %337 = vadd.xlane.f32.xlu0 %v336
    %v338 = vpop.xlane.xlu0 %337
    %v339 = vmax.f32 %v338, 1e-24
    %v340 = vrsqrt.pop %v339
    %v341 = vmul.f32 %v340, %v339
    %v342 = vmul.f32 %v341, %v340
    %v343 = vmul.f32 0.5, %v342
    %v344 = vsub.f32 1.5, %v343
    %v345 = vmul.f32 %v340, %v344
    %vm346 = vweird.f32 %v339
    %vm347 = vweird.f32 %v340
    %vm348 = vmor %vm346, %vm347
    %v349 = vsel %vm348, %v340, %v345
    %v350 = vmul.f32 %v283, %v349
    %v351 = vmul.f32 %v296, %v349
    %v352 = vmul.f32 %v309, %v349
    %v353 = vmul.f32 %v322, %v349
    %v358 = vrot.slane %v351, 6
    %v359 = vrot.slane %v352, 4
    %v360 = vrot.slane %v353, 2
    %v361 = vsel %vm329, %v350, %v358
    %vm362 = vcmask 1045508
    %v363 = vsel %vm362, %v359, %v360
    %vm364 = vcmask 1043456
    %v365 = vsel %vm364, %v361, %v363
    %367 = vst [vmem:[#allocation2] sm:$0xff] %v365
    // Predicated region
    $region14: #{_lambda_.7} parent=1 // pred_check
      _
    $region15: #{_lambda_.7} parent=1 // pred_check_branch
      %369 = sbr.rel (0) target = $region17
    $region16: #{_lambda_.7} parent=1 // pred_region
      %371 = vsyncadd [#allocation3], 0
      %s373 = sshll.u32 [#allocation2], 4
      %s374 = int_to_ptr.vmem [resolvable:$true] %s373
      %s375 = sshll.u32 %s3, 4
      %s376 = int_to_ptr.hbm [resolvable:$true] %s375
      %378 = dma.vmem_to_hbm [thread:$0]  %s374, 128, %s376, [#allocation3]
    $region17: #{_lambda_.7} parent=1 // pred_fallthru
      _
    // Predicated region
    $region18: #{_lambda_.7} parent=1 // pred_check
      _
    $region19: #{_lambda_.7} parent=1 // pred_check_branch
      %380 = sbr.rel (0) target = $region21
    $region20: #{_lambda_.7} parent=1 // pred_region
      %382 = dma.done [#allocation3], 128
    $region21: #{_lambda_.7} parent=1 // pred_fallthru
      _
    %383 = vsyncpa [#allocation3], 1

</llo_original>
